<compile_context>
chip_gen: v7x
topology: tpu7x:2x2x1
jax: 0.10.0
libtpu: 0.0.40
codegen_flags: <defaults>
</compile_context>

<pallas_src>
import jax
import jax.numpy as jnp
import numpy as np
from jax.experimental import pallas as pl
from jax.experimental.pallas import tpu as pltpu

NEG = -1e30  # bias for padded vocab columns


def _round_up(x, m):
    return (x + m - 1) // m * m


def _const_spec(shape):
    """Grid-invariant input: full-array block, single-buffered (no 2x VMEM)."""
    zeros = (0,) * len(shape)
    return pl.BlockSpec(shape, lambda j: zeros, pipeline_mode=pl.Buffered(1))


def _vmem_limit(nbytes):
    """Explicit scoped-VMEM cap: 2x working set + slack, floored at the default
    32 MiB (>= v5e's 16 MiB default), capped at 48 MiB (< v7x's 64 MiB physical)."""
    return int(min(max(2 * nbytes + (2 << 20), 32 << 20), 48 << 20))


# ----------------------------------------------------------------------------
# Kernels
# ----------------------------------------------------------------------------
def _make_lstm_kernel(num_layers, hidden_size, compute_dtype):
    """LSTMCell stack. Two MXU dots per layer (bf16 operands, f32 accumulation),
    all gate math in f32. Only the last layer's h is written out (dec_state is
    discarded by the module)."""
    def kernel(*refs):
        x_ref, h0_ref, c0_ref = refs[0], refs[1], refs[2]
        wih = refs[3:3 + num_layers]                       # (In_l, 4H) each
        whh = refs[3 + num_layers:3 + 2 * num_layers]      # (H, 4H) each
        bias = refs[3 + 2 * num_layers:3 + 3 * num_layers]  # (1, 4H) each (folded)
        h_last_ref = refs[3 + 3 * num_layers]
        H = hidden_size
        x = x_ref[...]                                     # (Bp, In) f32
        for l in range(num_layers):
            gates = (jnp.dot(x.astype(compute_dtype), wih[l][...],
                             preferred_element_type=jnp.float32)
                     + jnp.dot(h0_ref[l].astype(compute_dtype), whh[l][...],
                               preferred_element_type=jnp.float32)
                     + bias[l][...])
            i_g = jax.nn.sigmoid(gates[:, 0 * H:1 * H])
            f_g = jax.nn.sigmoid(gates[:, 1 * H:2 * H])
            g_g = jnp.tanh(gates[:, 2 * H:3 * H])
            o_g = jax.nn.sigmoid(gates[:, 3 * H:4 * H])
            c_new = f_g * c0_ref[l] + i_g * g_g
            x = o_g * jnp.tanh(c_new)   # inter-layer dropout: identity (inference)
        h_last_ref[...] = x             # final dropout: identity (inference)
    return kernel


def _make_proj_kernel(compute_dtype):
    """Word projection on one vocab tile + per-tile (max, sum-exp) partials.
    No cross-step state -> the vocab grid axis is fully parallel."""
    def kernel(h_ref, w_ref, b_ref, logits_ref, m_ref, l_ref):
        logits = (jnp.dot(h_ref[...].astype(compute_dtype), w_ref[...],
                          preferred_element_type=jnp.float32) + b_ref[...])
        logits_ref[...] = logits
        m = jnp.max(logits, axis=-1, keepdims=True)                    # (Bp, 1)
        l_ref[0] = jnp.sum(jnp.exp(logits - m), axis=-1, keepdims=True)
        m_ref[0] = m
    return kernel


def _logp_kernel(logits_ref, lse_ref, out_ref):
    out_ref[...] = logits_ref[...] - lse_ref[...]


# ----------------------------------------------------------------------------
# Parameter construction (PyTorch layouts) + packing for the kernels
# ----------------------------------------------------------------------------
def init_params(key, vocab_size, input_size, hidden_size, num_layers, emb_vocab):
    keys = iter(jax.random.split(key, 4 * num_layers + 3))
    bound = 1.0 / float(np.sqrt(hidden_size))

    def u(k, shape):
        return jax.random.uniform(k, shape, jnp.float32, -bound, bound)

    layers = []
    in_size = input_size
    for _ in range(num_layers):
        layers.append({
            "w_ih": u(next(keys), (4 * hidden_size, in_size)),      # PyTorch (4H, In)
            "w_hh": u(next(keys), (4 * hidden_size, hidden_size)),  # PyTorch (4H, H)
            "b_ih": u(next(keys), (4 * hidden_size,)),
            "b_hh": u(next(keys), (4 * hidden_size,)),
        })
        in_size = hidden_size
    return {
        "layers": layers,
        "out_w": u(next(keys), (vocab_size, hidden_size)),           # nn.Linear (V, H)
        "out_b": u(next(keys), (vocab_size,)),
        "emb": jax.random.normal(next(keys), (emb_vocab, input_size), jnp.float32),
    }


def pack_params(params, v_tile=512, weight_dtype=jnp.bfloat16):
    """Kernel layout: transposed per-layer weights in bf16, folded f32 biases,
    lane-dense (vocab padded to a multiple of the tile) bf16 word projection."""
    w_ih_t = [l["w_ih"].T.astype(weight_dtype) for l in params["layers"]]   # (In_l, 4H)
    w_hh_t = [l["w_hh"].T.astype(weight_dtype) for l in params["layers"]]   # (H, 4H)
    bias = [(l["b_ih"] + l["b_hh"]).reshape(1, -1).astype(jnp.float32)      # (1, 4H)
            for l in params["layers"]]
    v, h = params["out_w"].shape
    tv = min(int(v_tile), _round_up(v, 128))       # large tile, capped at padded vocab
    vp = _round_up(v, tv)
    w_out_t = (jnp.zeros((h, vp), weight_dtype)
               .at[:, :v].set(params["out_w"].T.astype(weight_dtype)))
    b_out_p = jnp.full((1, vp), NEG, jnp.float32).at[0, :v].set(params["out_b"])
    return {"w_ih_t": w_ih_t, "w_hh_t": w_hh_t, "bias": bias,
            "w_out_t": w_out_t, "b_out_p": b_out_p,
            "tv": tv, "compute_dtype": weight_dtype}


# ----------------------------------------------------------------------------
# Forward pass (mirrors DecoderRNN.forward, inference mode)
# ----------------------------------------------------------------------------
def decoder_rnn_forward(params, input_feed, hidden):
    """Returns (output, hidden, logits) exactly like the PyTorch module
    (the module returns `hidden` unchanged and discards dec_state)."""
    kp = params["kernel"]
    h0, c0 = hidden                                   # (L, B, H) each
    num_layers, batch, hidden_size = h0.shape
    vocab = params["out_b"].shape[0]
    cdt = kp["compute_dtype"]
    itemsize = jnp.dtype(cdt).itemsize

    # embedding lookup (data-dependent gather -> XLA)
    x = jnp.take(params["emb"], input_feed, axis=0).astype(jnp.float32)   # (B, In)
    in_size = x.shape[1]

    # pad batch rows to the bf16 sublane quantum (16); 8 suffices for pure f32
    row_q = 16 if itemsize == 2 else 8
    bp = _round_up(max(batch, 1), row_q)
    pad_b = bp - batch
    xp = jnp.pad(x, ((0, pad_b), (0, 0)))
    h0p = jnp.pad(h0, ((0, 0), (0, pad_b), (0, 0)))
    c0p = jnp.pad(c0, ((0, 0), (0, pad_b), (0, 0)))

    # ---- kernel 1: LSTMCell stack -------------------------------------------
    lstm_in_specs = ([_const_spec((bp, in_size)),
                      _const_spec((num_layers, bp, hidden_size)),
                      _const_spec((num_layers, bp, hidden_size))]
                     + [_const_spec(tuple(w.shape)) for w in kp["w_ih_t"]]
                     + [_const_spec(tuple(w.shape)) for w in kp["w_hh_t"]]
                     + [_const_spec(tuple(b.shape)) for b in kp["bias"]])
    lstm_bytes = (xp.size * 4 + h0p.size * 4 + c0p.size * 4
                  + sum(w.size * itemsize for w in kp["w_ih_t"])
                  + sum(w.size * itemsize for w in kp["w_hh_t"])
                  + sum(b.size * 4 for b in kp["bias"])
                  + bp * hidden_size * 4)
    h_last = pl.pallas_call(
        _make_lstm_kernel(num_layers, hidden_size, cdt),
        grid=(1,),
        in_specs=lstm_in_specs,
        out_specs=pl.BlockSpec((bp, hidden_size), lambda j: (0, 0)),
        out_shape=jax.ShapeDtypeStruct((bp, hidden_size), jnp.float32),
        compiler_params=pltpu.CompilerParams(
            dimension_semantics=("arbitrary",),
            vmem_limit_bytes=_vmem_limit(lstm_bytes)),
    )(xp, h0p, c0p, *kp["w_ih_t"], *kp["w_hh_t"], *kp["bias"])

    # ---- kernel 2: vocab-tiled projection (parallel) + per-tile partials ----
    tv = kp["tv"]
    vp = kp["w_out_t"].shape[1]
    n_v_tiles = vp // tv
    proj_bytes = (bp * hidden_size * 4
                  + 2 * (hidden_size * tv * itemsize + tv * 4)
                  + 2 * (bp * tv * 4 + 2 * bp * 4))
    logits_p, m_part, l_part = pl.pallas_call(
        _make_proj_kernel(cdt),
        grid=(n_v_tiles,),
        in_specs=[_const_spec((bp, hidden_size)),
                  pl.BlockSpec((hidden_size, tv), lambda j: (0, j)),
                  pl.BlockSpec((1, tv), lambda j: (0, j))],
        out_specs=(pl.BlockSpec((bp, tv), lambda j: (0, j)),
                   pl.BlockSpec((1, bp, 1), lambda j: (j, 0, 0)),
                   pl.BlockSpec((1, bp, 1), lambda j: (j, 0, 0))),
        out_shape=(jax.ShapeDtypeStruct((bp, vp), jnp.float32),
                   jax.ShapeDtypeStruct((n_v_tiles, bp, 1), jnp.float32),
                   jax.ShapeDtypeStruct((n_v_tiles, bp, 1), jnp.float32)),
        compiler_params=pltpu.CompilerParams(
            dimension_semantics=("parallel",),
            vmem_limit_bytes=_vmem_limit(proj_bytes)),
    )(h_last, kp["w_out_t"], kp["b_out_p"])

    # combine per-tile (max, sum-exp) partials -> final logsumexp (tiny reduction)
    m_max = jnp.max(m_part, axis=0)                                      # (bp, 1)
    lse = m_max + jnp.log(jnp.sum(jnp.exp(m_part - m_max) * l_part, axis=0))

    # ---- kernel 3: log-probs = logits - lse (parallel, large lane-dense tile)
    lt_tiles = 1
    for cand in range(n_v_tiles, 0, -1):
        if n_v_tiles % cand == 0 and cand * tv <= 4096:
            lt_tiles = cand
            break
    lt = lt_tiles * tv
    logp_bytes = bp * 4 + 2 * 2 * bp * lt * 4
    logp_p = pl.pallas_call(
        _logp_kernel,
        grid=(vp // lt,),
        in_specs=[pl.BlockSpec((bp, lt), lambda j: (0, j)),
                  _const_spec((bp, 1))],
        out_specs=pl.BlockSpec((bp, lt), lambda j: (0, j)),
        out_shape=jax.ShapeDtypeStruct((bp, vp), jnp.float32),
        compiler_params=pltpu.CompilerParams(
            dimension_semantics=("parallel",),
            vmem_limit_bytes=_vmem_limit(logp_bytes)),
    )(logits_p, lse)

    logits = logits_p[:batch, :vocab]
    output = logp_p[:batch, :vocab]
    return output, hidden, logits


# ----------------------------------------------------------------------------
# Pure-JAX reference (no Pallas), PyTorch layouts
# ----------------------------------------------------------------------------
def reference_forward(params, input_feed, hidden, compute_dtype=jnp.float32):
    """compute_dtype=bfloat16 mirrors the kernel's weight/LHS cast
    (f32 MXU accumulation, f32 gate / softmax math)."""
    h0, c0 = hidden
    hsz = h0.shape[-1]
    x = params["emb"][input_feed]

    def mm(a, b):
        return jnp.dot(a.astype(compute_dtype), b.astype(compute_dtype),
                       preferred_element_type=jnp.float32)

    for l, layer in enumerate(params["layers"]):
        gates = (mm(x, layer["w_ih"].T) + mm(h0[l], layer["w_hh"].T)
                 + layer["b_ih"] + layer["b_hh"])
        i_g = jax.nn.sigmoid(gates[:, 0:hsz])
        f_g = jax.nn.sigmoid(gates[:, hsz:2 * hsz])
        g_g = jnp.tanh(gates[:, 2 * hsz:3 * hsz])
        o_g = jax.nn.sigmoid(gates[:, 3 * hsz:4 * hsz])
        c_new = f_g * c0[l] + i_g * g_g
        x = o_g * jnp.tanh(c_new)
    logits = mm(x, params["out_w"].T) + params["out_b"]
    return jax.nn.log_softmax(logits, axis=-1), hidden, logits


# ----------------------------------------------------------------------------
if __name__ == "__main__":
    vocab_size, emb_vocab = 50, 100
    input_size, hidden_size = 256, 128
    num_layers, batch = 2, 2

    key = jax.random.PRNGKey(0)
    pkey, hkey, ckey, ikey = jax.random.split(key, 4)

    params = init_params(pkey, vocab_size, input_size, hidden_size,
                         num_layers, emb_vocab)
    params["kernel"] = pack_params(params, v_tile=512)   # tile capped at padded vocab

    input_feed = jax.random.randint(ikey, (batch,), 0, emb_vocab, jnp.int32)
    h0 = jax.random.normal(hkey, (num_layers, batch, hidden_size), jnp.float32)
    c0 = jax.random.normal(ckey, (num_layers, batch, hidden_size), jnp.float32)
    hidden = (h0, c0)

    output, hidden_out, logits = decoder_rnn_forward(params, input_feed, hidden)
    output, logits = jax.block_until_ready((output, logits))

    assert output.shape == (batch, vocab_size)
    assert logits.shape == (batch, vocab_size)
    assert hidden_out is hidden  # the module returns `hidden` unchanged

    # tight check vs a reference using the same bf16-weight / bf16-LHS numerics
    ref_out_bf, _, ref_logits_bf = reference_forward(
        params, input_feed, hidden, compute_dtype=jnp.bfloat16)
    np.testing.assert_allclose(np.asarray(logits), np.asarray(ref_logits_bf),
                               rtol=2e-3, atol=2e-3)
    np.testing.assert_allclose(np.asarray(output), np.asarray(ref_out_bf),
                               rtol=2e-3, atol=2e-3)

    # loose check vs the full-f32 reference (difference = bf16 weight quantization)
    ref_out_f32, _, ref_logits_f32 = reference_forward(
        params, input_feed, hidden, compute_dtype=jnp.float32)
    np.testing.assert_allclose(np.asarray(logits), np.asarray(ref_logits_f32),
                               rtol=5e-2, atol=5e-2)
    np.testing.assert_allclose(np.asarray(output), np.asarray(ref_out_f32),
                               rtol=5e-2, atol=5e-2)

    print("KERNEL_OK")
</pallas_src>

<mosaic_0001>
module attributes {stable_mosaic.version = 11 : i64} {
  func.func @kernel(%arg0: i32, %arg1: memref<16x256xf32, #tpu.memory_space<vmem>>, %arg2: memref<2x16x128xf32, #tpu.memory_space<vmem>>, %arg3: memref<2x16x128xf32, #tpu.memory_space<vmem>>, %arg4: memref<256x512xbf16, #tpu.memory_space<vmem>>, %arg5: memref<128x512xbf16, #tpu.memory_space<vmem>>, %arg6: memref<128x512xbf16, #tpu.memory_space<vmem>>, %arg7: memref<128x512xbf16, #tpu.memory_space<vmem>>, %arg8: memref<1x512xf32, #tpu.memory_space<vmem>>, %arg9: memref<1x512xf32, #tpu.memory_space<vmem>>, %arg10: memref<16x128xf32, #tpu.memory_space<vmem>>) attributes {dimension_semantics = [#tpu.dimension_semantics<arbitrary>], iteration_bounds = array<i64: 1>, scalar_prefetch = 0 : i64, scratch_operands = 0 : i64, tpu.core_type = #tpu.core_type<tc>, window_params = [{pipeline_mode = #tpu.pipeline_mode<synchronous>, transform_indices = @transform_0, window_bounds = array<i64: 16, 256>}, {pipeline_mode = #tpu.pipeline_mode<synchronous>, transform_indices = @transform_1, window_bounds = array<i64: 2, 16, 128>}, {pipeline_mode = #tpu.pipeline_mode<synchronous>, transform_indices = @transform_2, window_bounds = array<i64: 2, 16, 128>}, {pipeline_mode = #tpu.pipeline_mode<synchronous>, transform_indices = @transform_3, window_bounds = array<i64: 256, 512>}, {pipeline_mode = #tpu.pipeline_mode<synchronous>, transform_indices = @transform_4, window_bounds = array<i64: 128, 512>}, {pipeline_mode = #tpu.pipeline_mode<synchronous>, transform_indices = @transform_5, window_bounds = array<i64: 128, 512>}, {pipeline_mode = #tpu.pipeline_mode<synchronous>, transform_indices = @transform_6, window_bounds = array<i64: 128, 512>}, {pipeline_mode = #tpu.pipeline_mode<synchronous>, transform_indices = @transform_7, window_bounds = array<i64: 1, 512>}, {pipeline_mode = #tpu.pipeline_mode<synchronous>, transform_indices = @transform_8, window_bounds = array<i64: 1, 512>}, {pipeline_mode = #tpu.pipeline_mode<synchronous>, transform_indices = @transform_9, window_bounds = array<i64: 16, 128>}]} {
    %c0 = arith.constant 0 : index
    %c0_0 = arith.constant 0 : index
    %0 = vector.load %arg1[%c0, %c0_0] : memref<16x256xf32, #tpu.memory_space<vmem>>, vector<16x256xf32>
    %1 = arith.truncf %0 : vector<16x256xf32> to vector<16x256xbf16>
    %c0_1 = arith.constant 0 : index
    %c0_2 = arith.constant 0 : index
    %2 = vector.load %arg4[%c0_1, %c0_2] : memref<256x512xbf16, #tpu.memory_space<vmem>>, vector<256x512xbf16>
    %cst = arith.constant dense<0.000000e+00> : vector<16x512xf32>
    %3 = tpu.matmul %1, %2, %cst {dimension_numbers = #tpu.dot_dimension_numbers<[1], [0], [0], [1], [0, 0, 1, 1], [], []>} : vector<16x256xbf16>, vector<256x512xbf16>, vector<16x512xf32> -> vector<16x512xf32>
    %c0_3 = arith.constant 0 : index
    %c0_4 = arith.constant 0 : index
    %c0_5 = arith.constant 0 : index
    %4 = vector.load %arg2[%c0_3, %c0_4, %c0_5] : memref<2x16x128xf32, #tpu.memory_space<vmem>>, vector<1x16x128xf32>
    %5 = vector.shape_cast %4 : vector<1x16x128xf32> to vector<16x128xf32>
    %6 = arith.truncf %5 : vector<16x128xf32> to vector<16x128xbf16>
    %c0_6 = arith.constant 0 : index
    %c0_7 = arith.constant 0 : index
    %7 = vector.load %arg6[%c0_6, %c0_7] : memref<128x512xbf16, #tpu.memory_space<vmem>>, vector<128x512xbf16>
    %cst_8 = arith.constant dense<0.000000e+00> : vector<16x512xf32>
    %8 = tpu.matmul %6, %7, %cst_8 {dimension_numbers = #tpu.dot_dimension_numbers<[1], [0], [0], [1], [0, 0, 1, 1], [], []>} : vector<16x128xbf16>, vector<128x512xbf16>, vector<16x512xf32> -> vector<16x512xf32>
    %9 = arith.addf %3, %8 : vector<16x512xf32>
    %c0_9 = arith.constant 0 : index
    %c0_10 = arith.constant 0 : index
    %10 = vector.load %arg8[%c0_9, %c0_10] : memref<1x512xf32, #tpu.memory_space<vmem>>, vector<1x512xf32>
    %11 = vector.broadcast %10 : vector<1x512xf32> to vector<16x512xf32>
    %12 = arith.addf %9, %11 : vector<16x512xf32>
    %13 = vector.extract_strided_slice %12 {offsets = [0, 0], sizes = [16, 128], strides = [1, 1]} : vector<16x512xf32> to vector<16x128xf32>
    %14 = arith.negf %13 : vector<16x128xf32>
    %15 = math.exp %14 : vector<16x128xf32>
    %cst_11 = arith.constant 1.000000e+00 : f32
    %16 = vector.broadcast %cst_11 : f32 to vector<16x128xf32>
    %17 = arith.addf %16, %15 : vector<16x128xf32>
    %18 = arith.divf %16, %17 : vector<16x128xf32>
    %19 = vector.extract_strided_slice %12 {offsets = [0, 128], sizes = [16, 128], strides = [1, 1]} : vector<16x512xf32> to vector<16x128xf32>
    %20 = arith.negf %19 : vector<16x128xf32>
    %21 = math.exp %20 : vector<16x128xf32>
    %cst_12 = arith.constant 1.000000e+00 : f32
    %22 = vector.broadcast %cst_12 : f32 to vector<16x128xf32>
    %23 = arith.addf %22, %21 : vector<16x128xf32>
    %24 = arith.divf %22, %23 : vector<16x128xf32>
    %25 = vector.extract_strided_slice %12 {offsets = [0, 256], sizes = [16, 128], strides = [1, 1]} : vector<16x512xf32> to vector<16x128xf32>
    %26 = math.tanh %25 : vector<16x128xf32>
    %27 = vector.extract_strided_slice %12 {offsets = [0, 384], sizes = [16, 128], strides = [1, 1]} : vector<16x512xf32> to vector<16x128xf32>
    %28 = arith.negf %27 : vector<16x128xf32>
    %29 = math.exp %28 : vector<16x128xf32>
    %cst_13 = arith.constant 1.000000e+00 : f32
    %30 = vector.broadcast %cst_13 : f32 to vector<16x128xf32>
    %31 = arith.addf %30, %29 : vector<16x128xf32>
    %32 = arith.divf %30, %31 : vector<16x128xf32>
    %c0_14 = arith.constant 0 : index
    %c0_15 = arith.constant 0 : index
    %c0_16 = arith.constant 0 : index
    %33 = vector.load %arg3[%c0_14, %c0_15, %c0_16] : memref<2x16x128xf32, #tpu.memory_space<vmem>>, vector<1x16x128xf32>
    %34 = vector.shape_cast %33 : vector<1x16x128xf32> to vector<16x128xf32>
    %35 = arith.mulf %24, %34 : vector<16x128xf32>
    %36 = arith.mulf %18, %26 : vector<16x128xf32>
    %37 = arith.addf %35, %36 : vector<16x128xf32>
    %38 = math.tanh %37 : vector<16x128xf32>
    %39 = arith.mulf %32, %38 : vector<16x128xf32>
    %40 = arith.truncf %39 : vector<16x128xf32> to vector<16x128xbf16>
    %c0_17 = arith.constant 0 : index
    %c0_18 = arith.constant 0 : index
    %41 = vector.load %arg5[%c0_17, %c0_18] : memref<128x512xbf16, #tpu.memory_space<vmem>>, vector<128x512xbf16>
    %cst_19 = arith.constant dense<0.000000e+00> : vector<16x512xf32>
    %42 = tpu.matmul %40, %41, %cst_19 {dimension_numbers = #tpu.dot_dimension_numbers<[1], [0], [0], [1], [0, 0, 1, 1], [], []>} : vector<16x128xbf16>, vector<128x512xbf16>, vector<16x512xf32> -> vector<16x512xf32>
    %c1 = arith.constant 1 : index
    %c0_20 = arith.constant 0 : index
    %c0_21 = arith.constant 0 : index
    %43 = vector.load %arg2[%c1, %c0_20, %c0_21] : memref<2x16x128xf32, #tpu.memory_space<vmem>>, vector<1x16x128xf32>
    %44 = vector.shape_cast %43 : vector<1x16x128xf32> to vector<16x128xf32>
    %45 = arith.truncf %44 : vector<16x128xf32> to vector<16x128xbf16>
    %c0_22 = arith.constant 0 : index
    %c0_23 = arith.constant 0 : index
    %46 = vector.load %arg7[%c0_22, %c0_23] : memref<128x512xbf16, #tpu.memory_space<vmem>>, vector<128x512xbf16>
    %cst_24 = arith.constant dense<0.000000e+00> : vector<16x512xf32>
    %47 = tpu.matmul %45, %46, %cst_24 {dimension_numbers = #tpu.dot_dimension_numbers<[1], [0], [0], [1], [0, 0, 1, 1], [], []>} : vector<16x128xbf16>, vector<128x512xbf16>, vector<16x512xf32> -> vector<16x512xf32>
    %48 = arith.addf %42, %47 : vector<16x512xf32>
    %c0_25 = arith.constant 0 : index
    %c0_26 = arith.constant 0 : index
    %49 = vector.load %arg9[%c0_25, %c0_26] : memref<1x512xf32, #tpu.memory_space<vmem>>, vector<1x512xf32>
    %50 = vector.broadcast %49 : vector<1x512xf32> to vector<16x512xf32>
    %51 = arith.addf %48, %50 : vector<16x512xf32>
    %52 = vector.extract_strided_slice %51 {offsets = [0, 0], sizes = [16, 128], strides = [1, 1]} : vector<16x512xf32> to vector<16x128xf32>
    %53 = arith.negf %52 : vector<16x128xf32>
    %54 = math.exp %53 : vector<16x128xf32>
    %cst_27 = arith.constant 1.000000e+00 : f32
    %55 = vector.broadcast %cst_27 : f32 to vector<16x128xf32>
    %56 = arith.addf %55, %54 : vector<16x128xf32>
    %57 = arith.divf %55, %56 : vector<16x128xf32>
    %58 = vector.extract_strided_slice %51 {offsets = [0, 128], sizes = [16, 128], strides = [1, 1]} : vector<16x512xf32> to vector<16x128xf32>
    %59 = arith.negf %58 : vector<16x128xf32>
    %60 = math.exp %59 : vector<16x128xf32>
    %cst_28 = arith.constant 1.000000e+00 : f32
    %61 = vector.broadcast %cst_28 : f32 to vector<16x128xf32>
    %62 = arith.addf %61, %60 : vector<16x128xf32>
    %63 = arith.divf %61, %62 : vector<16x128xf32>
    %64 = vector.extract_strided_slice %51 {offsets = [0, 256], sizes = [16, 128], strides = [1, 1]} : vector<16x512xf32> to vector<16x128xf32>
    %65 = math.tanh %64 : vector<16x128xf32>
    %66 = vector.extract_strided_slice %51 {offsets = [0, 384], sizes = [16, 128], strides = [1, 1]} : vector<16x512xf32> to vector<16x128xf32>
    %67 = arith.negf %66 : vector<16x128xf32>
    %68 = math.exp %67 : vector<16x128xf32>
    %cst_29 = arith.constant 1.000000e+00 : f32
    %69 = vector.broadcast %cst_29 : f32 to vector<16x128xf32>
    %70 = arith.addf %69, %68 : vector<16x128xf32>
    %71 = arith.divf %69, %70 : vector<16x128xf32>
    %c1_30 = arith.constant 1 : index
    %c0_31 = arith.constant 0 : index
    %c0_32 = arith.constant 0 : index
    %72 = vector.load %arg3[%c1_30, %c0_31, %c0_32] : memref<2x16x128xf32, #tpu.memory_space<vmem>>, vector<1x16x128xf32>
    %73 = vector.shape_cast %72 : vector<1x16x128xf32> to vector<16x128xf32>
    %74 = arith.mulf %63, %73 : vector<16x128xf32>
    %75 = arith.mulf %57, %65 : vector<16x128xf32>
    %76 = arith.addf %74, %75 : vector<16x128xf32>
    %77 = math.tanh %76 : vector<16x128xf32>
    %78 = arith.mulf %71, %77 : vector<16x128xf32>
    %c0_33 = arith.constant 0 : index
    %c0_34 = arith.constant 0 : index
    %79 = vector.load %arg10[%c0_33, %c0_34] : memref<16x128xf32, #tpu.memory_space<vmem>>, vector<16x128xf32>
    tpu.vector_store %arg10[%c0_33, %c0_34], %78 {strides = array<i32>} : memref<16x128xf32, #tpu.memory_space<vmem>>, vector<16x128xf32>,
    return
  }
  func.func @transform_0(%arg0: i32) -> (i32, i32) {
    %c0_i32 = arith.constant 0 : i32
    %c0_i32_0 = arith.constant 0 : i32
    %c0_i32_1 = arith.constant 0 : i32
    return %c0_i32, %c0_i32_0 : i32, i32
  }
  func.func @transform_1(%arg0: i32) -> (i32, i32, i32) {
    %c0_i32 = arith.constant 0 : i32
    %c0_i32_0 = arith.constant 0 : i32
    %c0_i32_1 = arith.constant 0 : i32
    %c0_i32_2 = arith.constant 0 : i32
    return %c0_i32, %c0_i32_0, %c0_i32_1 : i32, i32, i32
  }
  func.func @transform_2(%arg0: i32) -> (i32, i32, i32) {
    %c0_i32 = arith.constant 0 : i32
    %c0_i32_0 = arith.constant 0 : i32
    %c0_i32_1 = arith.constant 0 : i32
    %c0_i32_2 = arith.constant 0 : i32
    return %c0_i32, %c0_i32_0, %c0_i32_1 : i32, i32, i32
  }
  func.func @transform_3(%arg0: i32) -> (i32, i32) {
    %c0_i32 = arith.constant 0 : i32
    %c0_i32_0 = arith.constant 0 : i32
    %c0_i32_1 = arith.constant 0 : i32
    return %c0_i32, %c0_i32_0 : i32, i32
  }
  func.func @transform_4(%arg0: i32) -> (i32, i32) {
    %c0_i32 = arith.constant 0 : i32
    %c0_i32_0 = arith.constant 0 : i32
    %c0_i32_1 = arith.constant 0 : i32
    return %c0_i32, %c0_i32_0 : i32, i32
  }
  func.func @transform_5(%arg0: i32) -> (i32, i32) {
    %c0_i32 = arith.constant 0 : i32
    %c0_i32_0 = arith.constant 0 : i32
    %c0_i32_1 = arith.constant 0 : i32
    return %c0_i32, %c0_i32_0 : i32, i32
  }
  func.func @transform_6(%arg0: i32) -> (i32, i32) {
    %c0_i32 = arith.constant 0 : i32
    %c0_i32_0 = arith.constant 0 : i32
    %c0_i32_1 = arith.constant 0 : i32
    return %c0_i32, %c0_i32_0 : i32, i32
  }
  func.func @transform_7(%arg0: i32) -> (i32, i32) {
    %c0_i32 = arith.constant 0 : i32
    %c0_i32_0 = arith.constant 0 : i32
    %c0_i32_1 = arith.constant 0 : i32
    return %c0_i32, %c0_i32_0 : i32, i32
  }
  func.func @transform_8(%arg0: i32) -> (i32, i32) {
    %c0_i32 = arith.constant 0 : i32
    %c0_i32_0 = arith.constant 0 : i32
    %c0_i32_1 = arith.constant 0 : i32
    return %c0_i32, %c0_i32_0 : i32, i32
  }
  func.func @transform_9(%arg0: i32) -> (i32, i32) {
    %c0_i32 = arith.constant 0 : i32
    %c0_i32_0 = arith.constant 0 : i32
    %c0_i32_1 = arith.constant 0 : i32
    return %c0_i32, %c0_i32_0 : i32, i32
  }
}

</mosaic_0001>

<llo_original>
// kernel: tpu_custom_call.1
$region0: #{tpu_custom_call.1}
  #allocation0 [shape = 'u32[]', space=smem, size = 0x4, offset = 0x4, fixed_abs, tag = 'smem constant byte address 0x4 - core index']
  #allocation1 [shape = 'u32[144,128]{1,0:T(1,128)}', space=vmem, size = 0x12000, scoped, tag = 'internal scratch']
  %s0 = inlined_call_operand.hbm [shape: f32[16,256], index: 0, kind: input, shape index: {}]
  %s1 = inlined_call_operand.hbm [shape: f32[2,16,128], index: 1, kind: input, shape index: {}]
  %s2 = inlined_call_operand.hbm [shape: f32[2,16,128], index: 2, kind: input, shape index: {}]
  %s3 = inlined_call_operand.hbm [shape: bf16[256,512], index: 3, kind: input, shape index: {}]
  %s4 = inlined_call_operand.hbm [shape: bf16[128,512], index: 4, kind: input, shape index: {}]
  %s5 = inlined_call_operand.hbm [shape: bf16[128,512], index: 5, kind: input, shape index: {}]
  %s6 = inlined_call_operand.hbm [shape: bf16[128,512], index: 6, kind: input, shape index: {}]
  %s7 = inlined_call_operand.vmem [shape: f32[1,512], index: 7, kind: input, shape index: {}]
  %s8 = inlined_call_operand.vmem [shape: f32[1,512], index: 8, kind: input, shape index: {}]
  %s9 = inlined_call_operand.hbm [shape: f32[16,128], index: 9, kind: output, shape index: {}]
  %s10 = sld [smem:[#allocation0]]
  $region74: #{tpu_custom_call.1} parent=0
    _
  %s12 = ssub.s32 1, %s10
  %s13 = scalar_select 0, %s12, %s10
  $region1: #{tpu_custom_call.1} parent=0
    #allocation2 [shape = 'u8[16384]{0}', space=vmem, size = 0x4000, scoped, tag = 'input window, operand 0, single buffered']
    #allocation3 [shape = 's32[1]{0}', space=sflag, size = 0x4, scoped, tag = 'scoped memory for tpu_custom_call.1']
    #allocation4 [shape = 's32[1]{0}', space=sflag, size = 0x4, scoped, tag = 'scoped memory for tpu_custom_call.1']
    #allocation5 [shape = 'u8[16384]{0}', space=vmem, size = 0x4000, scoped, tag = 'input window, operand 1, single buffered']
    #allocation6 [shape = 's32[1]{0}', space=sflag, size = 0x4, scoped, tag = 'scoped memory for tpu_custom_call.1']
    #allocation7 [shape = 'u8[16384]{0}', space=vmem, size = 0x4000, scoped, tag = 'input window, operand 2, single buffered']
    #allocation8 [shape = 'u8[262144]{0}', space=vmem, size = 0x40000, scoped, tag = 'input window, operand 3, single buffered']
    #allocation9 [shape = 's32[1]{0}', space=sflag, size = 0x4, scoped, tag = 'scoped memory for tpu_custom_call.1']
    #allocation10 [shape = 'u8[131072]{0}', space=vmem, size = 0x20000, scoped, tag = 'input window, operand 4, single buffered']
    #allocation11 [shape = 'u8[131072]{0}', space=vmem, size = 0x20000, scoped, tag = 'input window, operand 5, single buffered']
    #allocation12 [shape = 's32[1]{0}', space=sflag, size = 0x4, scoped, tag = 'scoped memory for tpu_custom_call.1']
    #allocation13 [shape = 'u8[131072]{0}', space=vmem, size = 0x20000, scoped, tag = 'input window, operand 6, single buffered']
    #allocation14 [shape = 'u8[8192]{0}', space=vmem, size = 0x2000, scoped, tag = 'output window, operand 0, single buffered']
    %14 = vsyncpa [#allocation3], 0
    %15 = vsyncpa [#allocation6], 0
    %16 = vsyncpa [#allocation9], 0
    %17 = vsyncpa [#allocation12], 0
    %18 = vsyncpa [#allocation4], 0
    // Predicated region
    $region2: #{tpu_custom_call.1} parent=1 // pred_check
      _
    $region3: #{tpu_custom_call.1} parent=1 // pred_check_branch
      %20 = sbr.rel (0) target = $region5
    $region4: #{tpu_custom_call.1} parent=1 // pred_region
      %s22 = ssub.s32 512, 512
      %23 = vsyncadd [#allocation3], %s22
      %s24 = sshll.u32 [#allocation2], 4
      %s25 = int_to_ptr.vmem [resolvable:$true] %s24
      %30 = dma.hbm_to_vmem [thread:$0]  %s0, 512, %s25, [#allocation3], 256, 256, 16
    $region5: #{tpu_custom_call.1} parent=1 // pred_fallthru
      _
    // Predicated region
    $region6: #{tpu_custom_call.1} parent=1 // pred_check
      _
    $region7: #{tpu_custom_call.1} parent=1 // pred_check_branch
      %32 = sbr.rel (0) target = $region9
    $region8: #{tpu_custom_call.1} parent=1 // pred_region
      %s34 = ssub.s32 512, 512
      %35 = vsyncadd [#allocation6], %s34
      %s36 = sshll.u32 [#allocation5], 4
      %s37 = int_to_ptr.vmem [resolvable:$true] %s36
      %42 = dma.hbm_to_vmem [thread:$0]  %s1, 512, %s37, [#allocation6], 128, 128, 8
    $region9: #{tpu_custom_call.1} parent=1 // pred_fallthru
      _
    // Predicated region
    $region10: #{tpu_custom_call.1} parent=1 // pred_check
      _
    $region11: #{tpu_custom_call.1} parent=1 // pred_check_branch
      %44 = sbr.rel (0) target = $region13
    $region12: #{tpu_custom_call.1} parent=1 // pred_region
      %s46 = ssub.s32 512, 512
      %47 = vsyncadd [#allocation6], %s46
      %s48 = sshll.u32 [#allocation7], 4
      %s49 = int_to_ptr.vmem [resolvable:$true] %s48
      %54 = dma.hbm_to_vmem [thread:$0]  %s2, 512, %s49, [#allocation6], 128, 128, 8
    $region13: #{tpu_custom_call.1} parent=1 // pred_fallthru
      _
    // Predicated region
    $region14: #{tpu_custom_call.1} parent=1 // pred_check
      _
    $region15: #{tpu_custom_call.1} parent=1 // pred_check_branch
      %56 = sbr.rel (0) target = $region17
    $region16: #{tpu_custom_call.1} parent=1 // pred_region
      %s58 = ssub.s32 8192, 8192
      %59 = vsyncadd [#allocation9], %s58
      %s60 = sshll.u32 [#allocation8], 4
      %s61 = int_to_ptr.vmem [resolvable:$true] %s60
      %66 = dma.hbm_to_vmem [thread:$0]  %s3, 8192, %s61, [#allocation9], 256, 256, 16
    $region17: #{tpu_custom_call.1} parent=1 // pred_fallthru
      _
    // Predicated region
    $region18: #{tpu_custom_call.1} parent=1 // pred_check
      _
    $region19: #{tpu_custom_call.1} parent=1 // pred_check_branch
      %68 = sbr.rel (0) target = $region21
    $region20: #{tpu_custom_call.1} parent=1 // pred_region
      %s70 = ssub.s32 4096, 4096
      %71 = vsyncadd [#allocation9], %s70
      %s72 = sshll.u32 [#allocation10], 4
      %s73 = int_to_ptr.vmem [resolvable:$true] %s72
      %78 = dma.hbm_to_vmem [thread:$0]  %s4, 4096, %s73, [#allocation9], 256, 256, 16
    $region21: #{tpu_custom_call.1} parent=1 // pred_fallthru
      _
    // Predicated region
    $region22: #{tpu_custom_call.1} parent=1 // pred_check
      _
    $region23: #{tpu_custom_call.1} parent=1 // pred_check_branch
      %80 = sbr.rel (0) target = $region25
    $region24: #{tpu_custom_call.1} parent=1 // pred_region
      %s82 = ssub.s32 4096, 4096
      %83 = vsyncadd [#allocation12], %s82
      %s84 = sshll.u32 [#allocation11], 4
      %s85 = int_to_ptr.vmem [resolvable:$true] %s84
      %90 = dma.hbm_to_vmem [thread:$0]  %s5, 4096, %s85, [#allocation12], 256, 256, 16
    $region25: #{tpu_custom_call.1} parent=1 // pred_fallthru
      _
    // Predicated region
    $region26: #{tpu_custom_call.1} parent=1 // pred_check
      _
    $region27: #{tpu_custom_call.1} parent=1 // pred_check_branch
      %92 = sbr.rel (0) target = $region29
    $region28: #{tpu_custom_call.1} parent=1 // pred_region
      %s94 = ssub.s32 4096, 4096
      %95 = vsyncadd [#allocation12], %s94
      %s96 = sshll.u32 [#allocation13], 4
      %s97 = int_to_ptr.vmem [resolvable:$true] %s96
      %102 = dma.hbm_to_vmem [thread:$0]  %s6, 4096, %s97, [#allocation12], 256, 256, 16
    $region29: #{tpu_custom_call.1} parent=1 // pred_fallthru
      _
    // Predicated region
    $region30: #{tpu_custom_call.1} parent=1 // pred_check
      _
    $region31: #{tpu_custom_call.1} parent=1 // pred_check_branch
      %104 = sbr.rel (0) target = $region33
    $region32: #{tpu_custom_call.1} parent=1 // pred_region
      _
    $region33: #{tpu_custom_call.1} parent=1 // pred_fallthru
      _
    // Predicated region
    $region34: #{tpu_custom_call.1} parent=1 // pred_check
      _
    $region35: #{tpu_custom_call.1} parent=1 // pred_check_branch
      %106 = sbr.rel (0) target = $region37
    $region36: #{tpu_custom_call.1} parent=1 // pred_region
      _
    $region37: #{tpu_custom_call.1} parent=1 // pred_fallthru
      _
    // Predicated region
    $region38: #{tpu_custom_call.1} parent=1 // pred_check
      _
    $region39: #{tpu_custom_call.1} parent=1 // pred_check_branch
      %108 = sbr.rel (0) target = $region41
    $region40: #{tpu_custom_call.1} parent=1 // pred_region
      %109 = dma.done [#allocation3], 512
    $region41: #{tpu_custom_call.1} parent=1 // pred_fallthru
      _
    // Predicated region
    $region42: #{tpu_custom_call.1} parent=1 // pred_check
      _
    $region43: #{tpu_custom_call.1} parent=1 // pred_check_branch
      %111 = sbr.rel (0) target = $region45
    $region44: #{tpu_custom_call.1} parent=1 // pred_region
      %112 = dma.done [#allocation6], 512
    $region45: #{tpu_custom_call.1} parent=1 // pred_fallthru
      _
    // Predicated region
    $region46: #{tpu_custom_call.1} parent=1 // pred_check
      _
    $region47: #{tpu_custom_call.1} parent=1 // pred_check_branch
      %114 = sbr.rel (0) target = $region49
    $region48: #{tpu_custom_call.1} parent=1 // pred_region
      %115 = dma.done [#allocation6], 512
    $region49: #{tpu_custom_call.1} parent=1 // pred_fallthru
      _
    // Predicated region
    $region50: #{tpu_custom_call.1} parent=1 // pred_check
      _
    $region51: #{tpu_custom_call.1} parent=1 // pred_check_branch
      %117 = sbr.rel (0) target = $region53
    $region52: #{tpu_custom_call.1} parent=1 // pred_region
      %118 = dma.done [#allocation9], 8192
    $region53: #{tpu_custom_call.1} parent=1 // pred_fallthru
      _
    // Predicated region
    $region54: #{tpu_custom_call.1} parent=1 // pred_check
      _
    $region55: #{tpu_custom_call.1} parent=1 // pred_check_branch
      %120 = sbr.rel (0) target = $region57
    $region56: #{tpu_custom_call.1} parent=1 // pred_region
      %121 = dma.done [#allocation9], 4096
    $region57: #{tpu_custom_call.1} parent=1 // pred_fallthru
      _
    // Predicated region
    $region58: #{tpu_custom_call.1} parent=1 // pred_check
      _
    $region59: #{tpu_custom_call.1} parent=1 // pred_check_branch
      %123 = sbr.rel (0) target = $region61
    $region60: #{tpu_custom_call.1} parent=1 // pred_region
      %124 = dma.done [#allocation12], 4096
    $region61: #{tpu_custom_call.1} parent=1 // pred_fallthru
      _
    // Predicated region
    $region62: #{tpu_custom_call.1} parent=1 // pred_check
      _
    $region63: #{tpu_custom_call.1} parent=1 // pred_check_branch
      %126 = sbr.rel (0) target = $region65
    $region64: #{tpu_custom_call.1} parent=1 // pred_region
      %127 = dma.done [#allocation12], 4096
    $region65: #{tpu_custom_call.1} parent=1 // pred_fallthru
      _
    %v129 = vld [vmem:[#allocation2] sm:$0xff]
    %v130 = vld [vmem:[#allocation2 + $0x8] sm:$0xff]
    %v131 = vld [vmem:[#allocation2 + $0x10] sm:$0xff]
    %v132 = vld [vmem:[#allocation2 + $0x18] sm:$0xff]
    %v133 = vpack.c.bf16 %v131, %v129
    %v134 = vpack.c.bf16 %v132, %v130
    %v135 = vld [vmem:[#allocation8] sm:$0xff]
    %v136 = vld [vmem:[#allocation8 + $0x8] sm:$0xff]
    %v137 = vld [vmem:[#allocation8 + $0x10] sm:$0xff]
    %v138 = vld [vmem:[#allocation8 + $0x18] sm:$0xff]
    %v139 = vld [vmem:[#allocation8 + $0x20] sm:$0xff]
    %v140 = vld [vmem:[#allocation8 + $0x28] sm:$0xff]
    %v141 = vld [vmem:[#allocation8 + $0x30] sm:$0xff]
    %v142 = vld [vmem:[#allocation8 + $0x38] sm:$0xff]
    %v143 = vld [vmem:[#allocation8 + $0x40] sm:$0xff]
    %v144 = vld [vmem:[#allocation8 + $0x48] sm:$0xff]
    %v145 = vld [vmem:[#allocation8 + $0x50] sm:$0xff]
    %v146 = vld [vmem:[#allocation8 + $0x58] sm:$0xff]
    %v147 = vld [vmem:[#allocation8 + $0x60] sm:$0xff]
    %v148 = vld [vmem:[#allocation8 + $0x68] sm:$0xff]
    %v149 = vld [vmem:[#allocation8 + $0x70] sm:$0xff]
    %v150 = vld [vmem:[#allocation8 + $0x78] sm:$0xff]
    %v151 = vld [vmem:[#allocation8 + $0x80] sm:$0xff]
    %v152 = vld [vmem:[#allocation8 + $0x88] sm:$0xff]
    %v153 = vld [vmem:[#allocation8 + $0x90] sm:$0xff]
    %v154 = vld [vmem:[#allocation8 + $0x98] sm:$0xff]
    %v155 = vld [vmem:[#allocation8 + $0xa0] sm:$0xff]
    %v156 = vld [vmem:[#allocation8 + $0xa8] sm:$0xff]
    %v157 = vld [vmem:[#allocation8 + $0xb0] sm:$0xff]
    %v158 = vld [vmem:[#allocation8 + $0xb8] sm:$0xff]
    %v159 = vld [vmem:[#allocation8 + $0xc0] sm:$0xff]
    %v160 = vld [vmem:[#allocation8 + $0xc8] sm:$0xff]
    %v161 = vld [vmem:[#allocation8 + $0xd0] sm:$0xff]
    %v162 = vld [vmem:[#allocation8 + $0xd8] sm:$0xff]
    %v163 = vld [vmem:[#allocation8 + $0xe0] sm:$0xff]
    %v164 = vld [vmem:[#allocation8 + $0xe8] sm:$0xff]
    %v165 = vld [vmem:[#allocation8 + $0xf0] sm:$0xff]
    %v166 = vld [vmem:[#allocation8 + $0xf8] sm:$0xff]
    %v167 = vld [vmem:[#allocation8 + $0x100] sm:$0xff]
    %v168 = vld [vmem:[#allocation8 + $0x108] sm:$0xff]
    %v169 = vld [vmem:[#allocation8 + $0x110] sm:$0xff]
    %v170 = vld [vmem:[#allocation8 + $0x118] sm:$0xff]
    %v171 = vld [vmem:[#allocation8 + $0x120] sm:$0xff]
    %v172 = vld [vmem:[#allocation8 + $0x128] sm:$0xff]
    %v173 = vld [vmem:[#allocation8 + $0x130] sm:$0xff]
    %v174 = vld [vmem:[#allocation8 + $0x138] sm:$0xff]
    %v175 = vld [vmem:[#allocation8 + $0x140] sm:$0xff]
    %v176 = vld [vmem:[#allocation8 + $0x148] sm:$0xff]
    %v177 = vld [vmem:[#allocation8 + $0x150] sm:$0xff]
    %v178 = vld [vmem:[#allocation8 + $0x158] sm:$0xff]
    %v179 = vld [vmem:[#allocation8 + $0x160] sm:$0xff]
    %v180 = vld [vmem:[#allocation8 + $0x168] sm:$0xff]
    %v181 = vld [vmem:[#allocation8 + $0x170] sm:$0xff]
    %v182 = vld [vmem:[#allocation8 + $0x178] sm:$0xff]
    %v183 = vld [vmem:[#allocation8 + $0x180] sm:$0xff]
    %v184 = vld [vmem:[#allocation8 + $0x188] sm:$0xff]
    %v185 = vld [vmem:[#allocation8 + $0x190] sm:$0xff]
    %v186 = vld [vmem:[#allocation8 + $0x198] sm:$0xff]
    %v187 = vld [vmem:[#allocation8 + $0x1a0] sm:$0xff]
    %v188 = vld [vmem:[#allocation8 + $0x1a8] sm:$0xff]
    %v189 = vld [vmem:[#allocation8 + $0x1b0] sm:$0xff]
    %v190 = vld [vmem:[#allocation8 + $0x1b8] sm:$0xff]
    %v191 = vld [vmem:[#allocation8 + $0x1c0] sm:$0xff]
    %v192 = vld [vmem:[#allocation8 + $0x1c8] sm:$0xff]
    %v193 = vld [vmem:[#allocation8 + $0x1d0] sm:$0xff]
    %v194 = vld [vmem:[#allocation8 + $0x1d8] sm:$0xff]
    %v195 = vld [vmem:[#allocation8 + $0x1e0] sm:$0xff]
    %v196 = vld [vmem:[#allocation8 + $0x1e8] sm:$0xff]
    %v197 = vld [vmem:[#allocation8 + $0x1f0] sm:$0xff]
    %v198 = vld [vmem:[#allocation8 + $0x1f8] sm:$0xff]
    %v199 = vld [vmem:[#allocation5] sm:$0xff]
    %v200 = vld [vmem:[#allocation5 + $0x8] sm:$0xff]
    %v201 = vpack.c.bf16 %v200, %v199
    %v202 = vld [vmem:[#allocation11] sm:$0xff]
    %v203 = vld [vmem:[#allocation11 + $0x8] sm:$0xff]
    %v204 = vld [vmem:[#allocation11 + $0x10] sm:$0xff]
    %v205 = vld [vmem:[#allocation11 + $0x18] sm:$0xff]
    %v206 = vld [vmem:[#allocation11 + $0x20] sm:$0xff]
    %v207 = vld [vmem:[#allocation11 + $0x28] sm:$0xff]
    %v208 = vld [vmem:[#allocation11 + $0x30] sm:$0xff]
    %v209 = vld [vmem:[#allocation11 + $0x38] sm:$0xff]
    %v210 = vld [vmem:[#allocation11 + $0x40] sm:$0xff]
    %v211 = vld [vmem:[#allocation11 + $0x48] sm:$0xff]
    %v212 = vld [vmem:[#allocation11 + $0x50] sm:$0xff]
    %v213 = vld [vmem:[#allocation11 + $0x58] sm:$0xff]
    %v214 = vld [vmem:[#allocation11 + $0x60] sm:$0xff]
    %v215 = vld [vmem:[#allocation11 + $0x68] sm:$0xff]
    %v216 = vld [vmem:[#allocation11 + $0x70] sm:$0xff]
    %v217 = vld [vmem:[#allocation11 + $0x78] sm:$0xff]
    %v218 = vld [vmem:[#allocation11 + $0x80] sm:$0xff]
    %v219 = vld [vmem:[#allocation11 + $0x88] sm:$0xff]
    %v220 = vld [vmem:[#allocation11 + $0x90] sm:$0xff]
    %v221 = vld [vmem:[#allocation11 + $0x98] sm:$0xff]
    %v222 = vld [vmem:[#allocation11 + $0xa0] sm:$0xff]
    %v223 = vld [vmem:[#allocation11 + $0xa8] sm:$0xff]
    %v224 = vld [vmem:[#allocation11 + $0xb0] sm:$0xff]
    %v225 = vld [vmem:[#allocation11 + $0xb8] sm:$0xff]
    %v226 = vld [vmem:[#allocation11 + $0xc0] sm:$0xff]
    %v227 = vld [vmem:[#allocation11 + $0xc8] sm:$0xff]
    %v228 = vld [vmem:[#allocation11 + $0xd0] sm:$0xff]
    %v229 = vld [vmem:[#allocation11 + $0xd8] sm:$0xff]
    %v230 = vld [vmem:[#allocation11 + $0xe0] sm:$0xff]
    %v231 = vld [vmem:[#allocation11 + $0xe8] sm:$0xff]
    %v232 = vld [vmem:[#allocation11 + $0xf0] sm:$0xff]
    %v233 = vld [vmem:[#allocation11 + $0xf8] sm:$0xff]
    %v266 = vunpack.c.l.b16 %v202
    %v267 = vunpack.c.h.b16 %v202
    %v268 = vunpack.c.l.b16 %v203
    %v269 = vunpack.c.h.b16 %v203
    %v270 = vunpack.c.l.b16 %v204
    %v271 = vunpack.c.h.b16 %v204
    %v272 = vunpack.c.l.b16 %v205
    %v273 = vunpack.c.h.b16 %v205
    %v274 = vunpack.c.l.b16 %v206
    %v275 = vunpack.c.h.b16 %v206
    %v276 = vunpack.c.l.b16 %v207
    %v277 = vunpack.c.h.b16 %v207
    %v278 = vunpack.c.l.b16 %v208
    %v279 = vunpack.c.h.b16 %v208
    %v280 = vunpack.c.l.b16 %v209
    %v281 = vunpack.c.h.b16 %v209
    %v282 = vunpack.c.l.b16 %v210
    %v283 = vunpack.c.h.b16 %v210
    %v284 = vunpack.c.l.b16 %v211
    %v285 = vunpack.c.h.b16 %v211
    %v286 = vunpack.c.l.b16 %v212
    %v287 = vunpack.c.h.b16 %v212
    %v288 = vunpack.c.l.b16 %v213
    %v289 = vunpack.c.h.b16 %v213
    %v290 = vunpack.c.l.b16 %v214
    %v291 = vunpack.c.h.b16 %v214
    %v292 = vunpack.c.l.b16 %v215
    %v293 = vunpack.c.h.b16 %v215
    %v294 = vunpack.c.l.b16 %v216
    %v295 = vunpack.c.h.b16 %v216
    %v296 = vunpack.c.l.b16 %v217
    %v297 = vunpack.c.h.b16 %v217
    %v298 = vunpack.c.l.b16 %v218
    %v299 = vunpack.c.h.b16 %v218
    %v300 = vunpack.c.l.b16 %v219
    %v301 = vunpack.c.h.b16 %v219
    %v302 = vunpack.c.l.b16 %v220
    %v303 = vunpack.c.h.b16 %v220
    %v304 = vunpack.c.l.b16 %v221
    %v305 = vunpack.c.h.b16 %v221
    %v306 = vunpack.c.l.b16 %v222
    %v307 = vunpack.c.h.b16 %v222
    %v308 = vunpack.c.l.b16 %v223
    %v309 = vunpack.c.h.b16 %v223
    %v310 = vunpack.c.l.b16 %v224
    %v311 = vunpack.c.h.b16 %v224
    %v312 = vunpack.c.l.b16 %v225
    %v313 = vunpack.c.h.b16 %v225
    %v314 = vunpack.c.l.b16 %v226
    %v315 = vunpack.c.h.b16 %v226
    %v316 = vunpack.c.l.b16 %v227
    %v317 = vunpack.c.h.b16 %v227
    %v318 = vunpack.c.l.b16 %v228
    %v319 = vunpack.c.h.b16 %v228
    %v320 = vunpack.c.l.b16 %v229
    %v321 = vunpack.c.h.b16 %v229
    %v322 = vunpack.c.l.b16 %v230
    %v323 = vunpack.c.h.b16 %v230
    %v324 = vunpack.c.l.b16 %v231
    %v325 = vunpack.c.h.b16 %v231
    %v326 = vunpack.c.l.b16 %v232
    %v327 = vunpack.c.h.b16 %v232
    %v328 = vunpack.c.l.b16 %v233
    %v329 = vunpack.c.h.b16 %v233
    %v330 = vpack.c.b16 %v270, %v266
    %v331 = vpack.c.b16 %v271, %v267
    %v332 = vpack.c.b16 %v272, %v268
    %v333 = vpack.c.b16 %v273, %v269
    %v334 = vpack.c.b16 %v278, %v274
    %v335 = vpack.c.b16 %v279, %v275
    %v336 = vpack.c.b16 %v280, %v276
    %v337 = vpack.c.b16 %v281, %v277
    %v338 = vpack.c.b16 %v286, %v282
    %v339 = vpack.c.b16 %v287, %v283
    %v340 = vpack.c.b16 %v288, %v284
    %v341 = vpack.c.b16 %v289, %v285
    %v342 = vpack.c.b16 %v294, %v290
    %v343 = vpack.c.b16 %v295, %v291
    %v344 = vpack.c.b16 %v296, %v292
    %v345 = vpack.c.b16 %v297, %v293
    %v346 = vpack.c.b16 %v302, %v298
    %v347 = vpack.c.b16 %v303, %v299
    %v348 = vpack.c.b16 %v304, %v300
    %v349 = vpack.c.b16 %v305, %v301
    %v350 = vpack.c.b16 %v310, %v306
    %v351 = vpack.c.b16 %v311, %v307
    %v352 = vpack.c.b16 %v312, %v308
    %v353 = vpack.c.b16 %v313, %v309
    %v354 = vpack.c.b16 %v318, %v314
    %v355 = vpack.c.b16 %v319, %v315
    %v356 = vpack.c.b16 %v320, %v316
    %v357 = vpack.c.b16 %v321, %v317
    %v358 = vpack.c.b16 %v326, %v322
    %v359 = vpack.c.b16 %v327, %v323
    %v360 = vpack.c.b16 %v328, %v324
    %v361 = vpack.c.b16 %v329, %v325
    %394 = vmatprep.subr.bf16.mxu0 %v331
    %395 = vmatpush1.bf16.msra.mxu0 %v330
    %396 = vmatprep.subr.bf16.mxu0 %v335
    %397 = vmatpush1.bf16.msra.mxu0 %v334
    %398 = vmatprep.subr.bf16.mxu0 %v339
    %399 = vmatpush1.bf16.msra.mxu0 %v338
    %400 = vmatprep.subr.bf16.mxu0 %v343
    %401 = vmatpush1.bf16.msra.mxu0 %v342
    %402 = vmatprep.subr.bf16.mxu0 %v347
    %403 = vmatpush1.bf16.msra.mxu0 %v346
    %404 = vmatprep.subr.bf16.mxu0 %v351
    %405 = vmatpush1.bf16.msra.mxu0 %v350
    %406 = vmatprep.subr.bf16.mxu0 %v355
    %407 = vmatpush1.bf16.msra.mxu0 %v354
    %408 = vmatprep.subr.bf16.mxu0 %v359
    %409 = vmatpush1.bf16.msra.mxu0 %v358
    %410 = vmatprep.subr.bf16.mxu0 0
    %411 = vmatpush1.bf16.msra.mxu0 0
    %412 = vmatprep.subr.bf16.mxu0 0
    %413 = vmatpush1.bf16.msra.mxu0 0
    %414 = vmatprep.subr.bf16.mxu0 0
    %415 = vmatpush1.bf16.msra.mxu0 0
    %416 = vmatprep.subr.bf16.mxu0 0
    %417 = vmatpush1.bf16.msra.mxu0 0
    %418 = vmatprep.subr.bf16.mxu0 0
    %419 = vmatpush1.bf16.msra.mxu0 0
    %420 = vmatprep.subr.bf16.mxu0 0
    %421 = vmatpush1.bf16.msra.mxu0 0
    %422 = vmatprep.subr.bf16.mxu0 0
    %423 = vmatpush1.bf16.msra.mxu0 0
    %424 = vmatprep.subr.bf16.mxu0 0
    %425 = vmatpush1.bf16.msra.mxu0 0
    %426 = vmatprep.mubr.bf16.mxu0 0
    %427 = vmatmul.mubr.bf16.gmra.mrb[0].mxu0 %v201
    %v428 = vpop.f32.mrb[0].mxu0
    %v429 = vadd.f32 0.0, %v428
    %v430 = vpop.f32.mrb[0].mxu0
    %v431 = vadd.f32 0.0, %v430
    %v432 = vpop.f32.mrb[0].mxu0
    %v433 = vadd.f32 0.0, %v432
    %v434 = vpop.f32.mrb[0].mxu0
    %v435 = vadd.f32 0.0, %v434
    %436 = vdwg.mxu0
    %437 = vmatprep.subr.bf16.mxu0 %v333
    %438 = vmatpush1.bf16.msra.mxu0 %v332
    %439 = vmatprep.subr.bf16.mxu0 %v337
    %440 = vmatpush1.bf16.msra.mxu0 %v336
    %441 = vmatprep.subr.bf16.mxu0 %v341
    %442 = vmatpush1.bf16.msra.mxu0 %v340
    %443 = vmatprep.subr.bf16.mxu0 %v345
    %444 = vmatpush1.bf16.msra.mxu0 %v344
    %445 = vmatprep.subr.bf16.mxu0 %v349
    %446 = vmatpush1.bf16.msra.mxu0 %v348
    %447 = vmatprep.subr.bf16.mxu0 %v353
    %448 = vmatpush1.bf16.msra.mxu0 %v352
    %449 = vmatprep.subr.bf16.mxu0 %v357
    %450 = vmatpush1.bf16.msra.mxu0 %v356
    %451 = vmatprep.subr.bf16.mxu0 %v361
    %452 = vmatpush1.bf16.msra.mxu0 %v360
    %453 = vmatprep.subr.bf16.mxu0 0
    %454 = vmatpush1.bf16.msra.mxu0 0
    %455 = vmatprep.subr.bf16.mxu0 0
    %456 = vmatpush1.bf16.msra.mxu0 0
    %457 = vmatprep.subr.bf16.mxu0 0
    %458 = vmatpush1.bf16.msra.mxu0 0
    %459 = vmatprep.subr.bf16.mxu0 0
    %460 = vmatpush1.bf16.msra.mxu0 0
    %461 = vmatprep.subr.bf16.mxu0 0
    %462 = vmatpush1.bf16.msra.mxu0 0
    %463 = vmatprep.subr.bf16.mxu0 0
    %464 = vmatpush1.bf16.msra.mxu0 0
    %465 = vmatprep.subr.bf16.mxu0 0
    %466 = vmatpush1.bf16.msra.mxu0 0
    %467 = vmatprep.subr.bf16.mxu0 0
    %468 = vmatpush1.bf16.msra.mxu0 0
    %469 = vmatprep.mubr.bf16.mxu0 0
    %470 = vmatmul.mubr.bf16.gmra.mrb[0].mxu0 %v201
    %v471 = vpop.f32.mrb[0].mxu0
    %v472 = vadd.f32 0.0, %v471
    %v473 = vpop.f32.mrb[0].mxu0
    %v474 = vadd.f32 0.0, %v473
    %v475 = vpop.f32.mrb[0].mxu0
    %v476 = vadd.f32 0.0, %v475
    %v477 = vpop.f32.mrb[0].mxu0
    %v478 = vadd.f32 0.0, %v477
    %479 = vdwg.mxu0
    %v544 = vunpack.c.l.b16 %v135
    %v545 = vunpack.c.h.b16 %v135
    %v546 = vunpack.c.l.b16 %v136
    %v547 = vunpack.c.h.b16 %v136
    %v548 = vunpack.c.l.b16 %v137
    %v549 = vunpack.c.h.b16 %v137
    %v550 = vunpack.c.l.b16 %v138
    %v551 = vunpack.c.h.b16 %v138
    %v552 = vunpack.c.l.b16 %v139
    %v553 = vunpack.c.h.b16 %v139
    %v554 = vunpack.c.l.b16 %v140
    %v555 = vunpack.c.h.b16 %v140
    %v556 = vunpack.c.l.b16 %v141
    %v557 = vunpack.c.h.b16 %v141
    %v558 = vunpack.c.l.b16 %v142
    %v559 = vunpack.c.h.b16 %v142
    %v560 = vunpack.c.l.b16 %v143
    %v561 = vunpack.c.h.b16 %v143
    %v562 = vunpack.c.l.b16 %v144
    %v563 = vunpack.c.h.b16 %v144
    %v564 = vunpack.c.l.b16 %v145
    %v565 = vunpack.c.h.b16 %v145
    %v566 = vunpack.c.l.b16 %v146
    %v567 = vunpack.c.h.b16 %v146
    %v568 = vunpack.c.l.b16 %v147
    %v569 = vunpack.c.h.b16 %v147
    %v570 = vunpack.c.l.b16 %v148
    %v571 = vunpack.c.h.b16 %v148
    %v572 = vunpack.c.l.b16 %v149
    %v573 = vunpack.c.h.b16 %v149
    %v574 = vunpack.c.l.b16 %v150
    %v575 = vunpack.c.h.b16 %v150
    %v576 = vunpack.c.l.b16 %v151
    %v577 = vunpack.c.h.b16 %v151
    %v578 = vunpack.c.l.b16 %v152
    %v579 = vunpack.c.h.b16 %v152
    %v580 = vunpack.c.l.b16 %v153
    %v581 = vunpack.c.h.b16 %v153
    %v582 = vunpack.c.l.b16 %v154
    %v583 = vunpack.c.h.b16 %v154
    %v584 = vunpack.c.l.b16 %v155
    %v585 = vunpack.c.h.b16 %v155
    %v586 = vunpack.c.l.b16 %v156
    %v587 = vunpack.c.h.b16 %v156
    %v588 = vunpack.c.l.b16 %v157
    %v589 = vunpack.c.h.b16 %v157
    %v590 = vunpack.c.l.b16 %v158
    %v591 = vunpack.c.h.b16 %v158
    %v592 = vunpack.c.l.b16 %v159
    %v593 = vunpack.c.h.b16 %v159
    %v594 = vunpack.c.l.b16 %v160
    %v595 = vunpack.c.h.b16 %v160
    %v596 = vunpack.c.l.b16 %v161
    %v597 = vunpack.c.h.b16 %v161
    %v598 = vunpack.c.l.b16 %v162
    %v599 = vunpack.c.h.b16 %v162
    %v600 = vunpack.c.l.b16 %v163
    %v601 = vunpack.c.h.b16 %v163
    %v602 = vunpack.c.l.b16 %v164
    %v603 = vunpack.c.h.b16 %v164
    %v604 = vunpack.c.l.b16 %v165
    %v605 = vunpack.c.h.b16 %v165
    %v606 = vunpack.c.l.b16 %v166
    %v607 = vunpack.c.h.b16 %v166
    %v608 = vunpack.c.l.b16 %v167
    %v609 = vunpack.c.h.b16 %v167
    %v610 = vunpack.c.l.b16 %v168
    %v611 = vunpack.c.h.b16 %v168
    %v612 = vunpack.c.l.b16 %v169
    %v613 = vunpack.c.h.b16 %v169
    %v614 = vunpack.c.l.b16 %v170
    %v615 = vunpack.c.h.b16 %v170
    %v616 = vunpack.c.l.b16 %v171
    %v617 = vunpack.c.h.b16 %v171
    %v618 = vunpack.c.l.b16 %v172
    %v619 = vunpack.c.h.b16 %v172
    %v620 = vunpack.c.l.b16 %v173
    %v621 = vunpack.c.h.b16 %v173
    %v622 = vunpack.c.l.b16 %v174
    %v623 = vunpack.c.h.b16 %v174
    %v624 = vunpack.c.l.b16 %v175
    %v625 = vunpack.c.h.b16 %v175
    %v626 = vunpack.c.l.b16 %v176
    %v627 = vunpack.c.h.b16 %v176
    %v628 = vunpack.c.l.b16 %v177
    %v629 = vunpack.c.h.b16 %v177
    %v630 = vunpack.c.l.b16 %v178
    %v631 = vunpack.c.h.b16 %v178
    %v632 = vunpack.c.l.b16 %v179
    %v633 = vunpack.c.h.b16 %v179
    %v634 = vunpack.c.l.b16 %v180
    %v635 = vunpack.c.h.b16 %v180
    %v636 = vunpack.c.l.b16 %v181
    %v637 = vunpack.c.h.b16 %v181
    %v638 = vunpack.c.l.b16 %v182
    %v639 = vunpack.c.h.b16 %v182
    %v640 = vunpack.c.l.b16 %v183
    %v641 = vunpack.c.h.b16 %v183
    %v642 = vunpack.c.l.b16 %v184
    %v643 = vunpack.c.h.b16 %v184
    %v644 = vunpack.c.l.b16 %v185
    %v645 = vunpack.c.h.b16 %v185
    %v646 = vunpack.c.l.b16 %v186
    %v647 = vunpack.c.h.b16 %v186
    %v648 = vunpack.c.l.b16 %v187
    %v649 = vunpack.c.h.b16 %v187
    %v650 = vunpack.c.l.b16 %v188
    %v651 = vunpack.c.h.b16 %v188
    %v652 = vunpack.c.l.b16 %v189
    %v653 = vunpack.c.h.b16 %v189
    %v654 = vunpack.c.l.b16 %v190
    %v655 = vunpack.c.h.b16 %v190
    %v656 = vunpack.c.l.b16 %v191
    %v657 = vunpack.c.h.b16 %v191
    %v658 = vunpack.c.l.b16 %v192
    %v659 = vunpack.c.h.b16 %v192
    %v660 = vunpack.c.l.b16 %v193
    %v661 = vunpack.c.h.b16 %v193
    %v662 = vunpack.c.l.b16 %v194
    %v663 = vunpack.c.h.b16 %v194
    %v664 = vunpack.c.l.b16 %v195
    %v665 = vunpack.c.h.b16 %v195
    %v666 = vunpack.c.l.b16 %v196
    %v667 = vunpack.c.h.b16 %v196
    %v668 = vunpack.c.l.b16 %v197
    %v669 = vunpack.c.h.b16 %v197
    %v670 = vunpack.c.l.b16 %v198
    %v671 = vunpack.c.h.b16 %v198
    %v672 = vpack.c.b16 %v548, %v544
    %v673 = vpack.c.b16 %v549, %v545
    %v674 = vpack.c.b16 %v550, %v546
    %v675 = vpack.c.b16 %v551, %v547
    %v676 = vpack.c.b16 %v556, %v552
    %v677 = vpack.c.b16 %v557, %v553
    %v678 = vpack.c.b16 %v558, %v554
    %v679 = vpack.c.b16 %v559, %v555
    %v680 = vpack.c.b16 %v564, %v560
    %v681 = vpack.c.b16 %v565, %v561
    %v682 = vpack.c.b16 %v566, %v562
    %v683 = vpack.c.b16 %v567, %v563
    %v684 = vpack.c.b16 %v572, %v568
    %v685 = vpack.c.b16 %v573, %v569
    %v686 = vpack.c.b16 %v574, %v570
    %v687 = vpack.c.b16 %v575, %v571
    %v688 = vpack.c.b16 %v580, %v576
    %v689 = vpack.c.b16 %v581, %v577
    %v690 = vpack.c.b16 %v582, %v578
    %v691 = vpack.c.b16 %v583, %v579
    %v692 = vpack.c.b16 %v588, %v584
    %v693 = vpack.c.b16 %v589, %v585
    %v694 = vpack.c.b16 %v590, %v586
    %v695 = vpack.c.b16 %v591, %v587
    %v696 = vpack.c.b16 %v596, %v592
    %v697 = vpack.c.b16 %v597, %v593
    %v698 = vpack.c.b16 %v598, %v594
    %v699 = vpack.c.b16 %v599, %v595
    %v700 = vpack.c.b16 %v604, %v600
    %v701 = vpack.c.b16 %v605, %v601
    %v702 = vpack.c.b16 %v606, %v602
    %v703 = vpack.c.b16 %v607, %v603
    %v704 = vpack.c.b16 %v612, %v608
    %v705 = vpack.c.b16 %v613, %v609
    %v706 = vpack.c.b16 %v614, %v610
    %v707 = vpack.c.b16 %v615, %v611
    %v708 = vpack.c.b16 %v620, %v616
    %v709 = vpack.c.b16 %v621, %v617
    %v710 = vpack.c.b16 %v622, %v618
    %v711 = vpack.c.b16 %v623, %v619
    %v712 = vpack.c.b16 %v628, %v624
    %v713 = vpack.c.b16 %v629, %v625
    %v714 = vpack.c.b16 %v630, %v626
    %v715 = vpack.c.b16 %v631, %v627
    %v716 = vpack.c.b16 %v636, %v632
    %v717 = vpack.c.b16 %v637, %v633
    %v718 = vpack.c.b16 %v638, %v634
    %v719 = vpack.c.b16 %v639, %v635
    %v720 = vpack.c.b16 %v644, %v640
    %v721 = vpack.c.b16 %v645, %v641
    %v722 = vpack.c.b16 %v646, %v642
    %v723 = vpack.c.b16 %v647, %v643
    %v724 = vpack.c.b16 %v652, %v648
    %v725 = vpack.c.b16 %v653, %v649
    %v726 = vpack.c.b16 %v654, %v650
    %v727 = vpack.c.b16 %v655, %v651
    %v728 = vpack.c.b16 %v660, %v656
    %v729 = vpack.c.b16 %v661, %v657
    %v730 = vpack.c.b16 %v662, %v658
    %v731 = vpack.c.b16 %v663, %v659
    %v732 = vpack.c.b16 %v668, %v664
    %v733 = vpack.c.b16 %v669, %v665
    %v734 = vpack.c.b16 %v670, %v666
    %v735 = vpack.c.b16 %v671, %v667
    %800 = vmatprep.subr.bf16.mxu0 %v673
    %801 = vmatpush1.bf16.msra.mxu0 %v672
    %802 = vmatprep.subr.bf16.mxu0 %v677
    %803 = vmatpush1.bf16.msra.mxu0 %v676
    %804 = vmatprep.subr.bf16.mxu0 %v681
    %805 = vmatpush1.bf16.msra.mxu0 %v680
    %806 = vmatprep.subr.bf16.mxu0 %v685
    %807 = vmatpush1.bf16.msra.mxu0 %v684
    %808 = vmatprep.subr.bf16.mxu0 %v689
    %809 = vmatpush1.bf16.msra.mxu0 %v688
    %810 = vmatprep.subr.bf16.mxu0 %v693
    %811 = vmatpush1.bf16.msra.mxu0 %v692
    %812 = vmatprep.subr.bf16.mxu0 %v697
    %813 = vmatpush1.bf16.msra.mxu0 %v696
    %814 = vmatprep.subr.bf16.mxu0 %v701
    %815 = vmatpush1.bf16.msra.mxu0 %v700
    %816 = vmatprep.subr.bf16.mxu0 %v705
    %817 = vmatpush1.bf16.msra.mxu0 %v704
    %818 = vmatprep.subr.bf16.mxu0 %v709
    %819 = vmatpush1.bf16.msra.mxu0 %v708
    %820 = vmatprep.subr.bf16.mxu0 %v713
    %821 = vmatpush1.bf16.msra.mxu0 %v712
    %822 = vmatprep.subr.bf16.mxu0 %v717
    %823 = vmatpush1.bf16.msra.mxu0 %v716
    %824 = vmatprep.subr.bf16.mxu0 %v721
    %825 = vmatpush1.bf16.msra.mxu0 %v720
    %826 = vmatprep.subr.bf16.mxu0 %v725
    %827 = vmatpush1.bf16.msra.mxu0 %v724
    %828 = vmatprep.subr.bf16.mxu0 %v729
    %829 = vmatpush1.bf16.msra.mxu0 %v728
    %830 = vmatprep.subr.bf16.mxu0 %v733
    %831 = vmatpush1.bf16.msra.mxu0 %v732
    %832 = vmatprep.mubr.bf16.mxu0 %v134
    %833 = vmatmul.mubr.bf16.gmra.mrb[0].mxu0 %v133
    %v834 = vpop.f32.mrb[0].mxu0
    %v835 = vadd.f32 %v429, %v834
    %v836 = vpop.f32.mrb[0].mxu0
    %v837 = vadd.f32 %v431, %v836
    %v838 = vpop.f32.mrb[0].mxu0
    %v839 = vadd.f32 %v433, %v838
    %v840 = vpop.f32.mrb[0].mxu0
    %v841 = vadd.f32 %v435, %v840
    %842 = vdwg.mxu0
    %843 = vmatprep.subr.bf16.mxu0 %v675
    %844 = vmatpush1.bf16.msra.mxu0 %v674
    %845 = vmatprep.subr.bf16.mxu0 %v679
    %846 = vmatpush1.bf16.msra.mxu0 %v678
    %847 = vmatprep.subr.bf16.mxu0 %v683
    %848 = vmatpush1.bf16.msra.mxu0 %v682
    %849 = vmatprep.subr.bf16.mxu0 %v687
    %850 = vmatpush1.bf16.msra.mxu0 %v686
    %851 = vmatprep.subr.bf16.mxu0 %v691
    %852 = vmatpush1.bf16.msra.mxu0 %v690
    %853 = vmatprep.subr.bf16.mxu0 %v695
    %854 = vmatpush1.bf16.msra.mxu0 %v694
    %855 = vmatprep.subr.bf16.mxu0 %v699
    %856 = vmatpush1.bf16.msra.mxu0 %v698
    %857 = vmatprep.subr.bf16.mxu0 %v703
    %858 = vmatpush1.bf16.msra.mxu0 %v702
    %859 = vmatprep.subr.bf16.mxu0 %v707
    %860 = vmatpush1.bf16.msra.mxu0 %v706
    %861 = vmatprep.subr.bf16.mxu0 %v711
    %862 = vmatpush1.bf16.msra.mxu0 %v710
    %863 = vmatprep.subr.bf16.mxu0 %v715
    %864 = vmatpush1.bf16.msra.mxu0 %v714
    %865 = vmatprep.subr.bf16.mxu0 %v719
    %866 = vmatpush1.bf16.msra.mxu0 %v718
    %867 = vmatprep.subr.bf16.mxu0 %v723
    %868 = vmatpush1.bf16.msra.mxu0 %v722
    %869 = vmatprep.subr.bf16.mxu0 %v727
    %870 = vmatpush1.bf16.msra.mxu0 %v726
    %871 = vmatprep.subr.bf16.mxu0 %v731
    %872 = vmatpush1.bf16.msra.mxu0 %v730
    %873 = vmatprep.subr.bf16.mxu0 %v735
    %874 = vmatpush1.bf16.msra.mxu0 %v734
    %875 = vmatprep.mubr.bf16.mxu0 %v134
    %876 = vmatmul.mubr.bf16.gmra.mrb[0].mxu0 %v133
    %v877 = vpop.f32.mrb[0].mxu0
    %v878 = vadd.f32 %v472, %v877
    %v879 = vpop.f32.mrb[0].mxu0
    %v880 = vadd.f32 %v474, %v879
    %v881 = vpop.f32.mrb[0].mxu0
    %v882 = vadd.f32 %v476, %v881
    %v883 = vpop.f32.mrb[0].mxu0
    %v884 = vadd.f32 %v478, %v883
    %885 = vdwg.mxu0
    %v886 = vld [vmem:[%s7] sm:$0xf]
    %v888 = vlaneseq
    %v889 = vshrl.u32 %v888, 7
    %v890 = vsub.s32 0, %v889
    %v891 = vrot.slane %v886, %v890
    %v892 = vlaneseq
    %v893 = vshrl.u32 %v892, 7
    %v894 = vsub.s32 1, %v893
    %v895 = vrot.slane %v886, %v894
    %v896 = vlaneseq
    %v897 = vshrl.u32 %v896, 7
    %v898 = vsub.s32 2, %v897
    %v899 = vrot.slane %v886, %v898
    %v900 = vlaneseq
    %v901 = vshrl.u32 %v900, 7
    %v902 = vsub.s32 3, %v901
    %v903 = vrot.slane %v886, %v902
    %v908 = vadd.f32 %v835, %v891
    %v909 = vadd.f32 %v837, %v895
    %v910 = vadd.f32 %v878, %v899
    %v911 = vadd.f32 %v880, %v903
    %v912 = vadd.f32 %v839, %v891
    %v913 = vadd.f32 %v841, %v895
    %v914 = vadd.f32 %v882, %v899
    %v915 = vadd.f32 %v884, %v903
    %v916 = vxor.u32 %v908, 2147483648
    %v917 = vxor.u32 %v912, 2147483648
    %v918 = vmul.f32 %v916, 1.442695
    %v919 = vpow.pop %v918
    %v920 = vmul.f32 %v917, 1.442695
    %v921 = vpow.pop %v920
    %v922 = vadd.f32 %v919, 1.0
    %v923 = vadd.f32 %v921, 1.0
    %v924 = vrcp.pop %v922
    %v925 = vmul.f32 1.0, %v924
    %v926 = vrcp.pop %v923
    %v927 = vmul.f32 1.0, %v926
    %v928 = vxor.u32 %v909, 2147483648
    %v929 = vxor.u32 %v913, 2147483648
    %v930 = vmul.f32 %v928, 1.442695
    %v931 = vpow.pop %v930
    %v932 = vmul.f32 %v929, 1.442695
    %v933 = vpow.pop %v932
    %v934 = vadd.f32 %v931, 1.0
    %v935 = vadd.f32 %v933, 1.0
    %v936 = vrcp.pop %v934
    %v937 = vmul.f32 1.0, %v936
    %v938 = vrcp.pop %v935
    %v939 = vmul.f32 1.0, %v938
    %v940 = vtanh.pop %v910
    %v941 = vtanh.pop %v914
    %v942 = vxor.u32 %v911, 2147483648
    %v943 = vxor.u32 %v915, 2147483648
    %v944 = vmul.f32 %v942, 1.442695
    %v945 = vpow.pop %v944
    %v946 = vmul.f32 %v943, 1.442695
    %v947 = vpow.pop %v946
    %v948 = vadd.f32 %v945, 1.0
    %v949 = vadd.f32 %v947, 1.0
    %v950 = vrcp.pop %v948
    %v951 = vmul.f32 1.0, %v950
    %v952 = vrcp.pop %v949
    %v953 = vmul.f32 1.0, %v952
    %v954 = vld [vmem:[#allocation7] sm:$0xff]
    %v955 = vld [vmem:[#allocation7 + $0x8] sm:$0xff]
    %v956 = vmul.f32 %v937, %v954
    %v957 = vmul.f32 %v939, %v955
    %v958 = vmul.f32 %v925, %v940
    %v959 = vmul.f32 %v927, %v941
    %v960 = vadd.f32 %v956, %v958
    %v961 = vadd.f32 %v957, %v959
    %v962 = vtanh.pop %v960
    %v963 = vtanh.pop %v961
    %v964 = vmul.f32 %v951, %v962
    %v965 = vmul.f32 %v953, %v963
    %v966 = vpack.c.bf16 %v965, %v964
    %v967 = vld [vmem:[#allocation10] sm:$0xff]
    %v968 = vld [vmem:[#allocation10 + $0x8] sm:$0xff]
    %v969 = vld [vmem:[#allocation10 + $0x10] sm:$0xff]
    %v970 = vld [vmem:[#allocation10 + $0x18] sm:$0xff]
    %v971 = vld [vmem:[#allocation10 + $0x20] sm:$0xff]
    %v972 = vld [vmem:[#allocation10 + $0x28] sm:$0xff]
    %v973 = vld [vmem:[#allocation10 + $0x30] sm:$0xff]
    %v974 = vld [vmem:[#allocation10 + $0x38] sm:$0xff]
    %v975 = vld [vmem:[#allocation10 + $0x40] sm:$0xff]
    %v976 = vld [vmem:[#allocation10 + $0x48] sm:$0xff]
    %v977 = vld [vmem:[#allocation10 + $0x50] sm:$0xff]
    %v978 = vld [vmem:[#allocation10 + $0x58] sm:$0xff]
    %v979 = vld [vmem:[#allocation10 + $0x60] sm:$0xff]
    %v980 = vld [vmem:[#allocation10 + $0x68] sm:$0xff]
    %v981 = vld [vmem:[#allocation10 + $0x70] sm:$0xff]
    %v982 = vld [vmem:[#allocation10 + $0x78] sm:$0xff]
    %v983 = vld [vmem:[#allocation10 + $0x80] sm:$0xff]
    %v984 = vld [vmem:[#allocation10 + $0x88] sm:$0xff]
    %v985 = vld [vmem:[#allocation10 + $0x90] sm:$0xff]
    %v986 = vld [vmem:[#allocation10 + $0x98] sm:$0xff]
    %v987 = vld [vmem:[#allocation10 + $0xa0] sm:$0xff]
    %v988 = vld [vmem:[#allocation10 + $0xa8] sm:$0xff]
    %v989 = vld [vmem:[#allocation10 + $0xb0] sm:$0xff]
    %v990 = vld [vmem:[#allocation10 + $0xb8] sm:$0xff]
    %v991 = vld [vmem:[#allocation10 + $0xc0] sm:$0xff]
    %v992 = vld [vmem:[#allocation10 + $0xc8] sm:$0xff]
    %v993 = vld [vmem:[#allocation10 + $0xd0] sm:$0xff]
    %v994 = vld [vmem:[#allocation10 + $0xd8] sm:$0xff]
    %v995 = vld [vmem:[#allocation10 + $0xe0] sm:$0xff]
    %v996 = vld [vmem:[#allocation10 + $0xe8] sm:$0xff]
    %v997 = vld [vmem:[#allocation10 + $0xf0] sm:$0xff]
    %v998 = vld [vmem:[#allocation10 + $0xf8] sm:$0xff]
    %s999 = scalar_lea.vmem [#allocation5], 16
    %v1000 = vld [vmem:[%s999] sm:$0xff]
    %v1001 = vld [vmem:[%s999 + $0x8] sm:$0xff]
    %v1002 = vpack.c.bf16 %v1001, %v1000
    %v1003 = vld [vmem:[#allocation13] sm:$0xff]
    %v1004 = vld [vmem:[#allocation13 + $0x8] sm:$0xff]
    %v1005 = vld [vmem:[#allocation13 + $0x10] sm:$0xff]
    %v1006 = vld [vmem:[#allocation13 + $0x18] sm:$0xff]
    %v1007 = vld [vmem:[#allocation13 + $0x20] sm:$0xff]
    %v1008 = vld [vmem:[#allocation13 + $0x28] sm:$0xff]
    %v1009 = vld [vmem:[#allocation13 + $0x30] sm:$0xff]
    %v1010 = vld [vmem:[#allocation13 + $0x38] sm:$0xff]
    %v1011 = vld [vmem:[#allocation13 + $0x40] sm:$0xff]
    %v1012 = vld [vmem:[#allocation13 + $0x48] sm:$0xff]
    %v1013 = vld [vmem:[#allocation13 + $0x50] sm:$0xff]
    %v1014 = vld [vmem:[#allocation13 + $0x58] sm:$0xff]
    %v1015 = vld [vmem:[#allocation13 + $0x60] sm:$0xff]
    %v1016 = vld [vmem:[#allocation13 + $0x68] sm:$0xff]
    %v1017 = vld [vmem:[#allocation13 + $0x70] sm:$0xff]
    %v1018 = vld [vmem:[#allocation13 + $0x78] sm:$0xff]
    %v1019 = vld [vmem:[#allocation13 + $0x80] sm:$0xff]
    %v1020 = vld [vmem:[#allocation13 + $0x88] sm:$0xff]
    %v1021 = vld [vmem:[#allocation13 + $0x90] sm:$0xff]
    %v1022 = vld [vmem:[#allocation13 + $0x98] sm:$0xff]
    %v1023 = vld [vmem:[#allocation13 + $0xa0] sm:$0xff]
    %v1024 = vld [vmem:[#allocation13 + $0xa8] sm:$0xff]
    %v1025 = vld [vmem:[#allocation13 + $0xb0] sm:$0xff]
    %v1026 = vld [vmem:[#allocation13 + $0xb8] sm:$0xff]
    %v1027 = vld [vmem:[#allocation13 + $0xc0] sm:$0xff]
    %v1028 = vld [vmem:[#allocation13 + $0xc8] sm:$0xff]
    %v1029 = vld [vmem:[#allocation13 + $0xd0] sm:$0xff]
    %v1030 = vld [vmem:[#allocation13 + $0xd8] sm:$0xff]
    %v1031 = vld [vmem:[#allocation13 + $0xe0] sm:$0xff]
    %v1032 = vld [vmem:[#allocation13 + $0xe8] sm:$0xff]
    %v1033 = vld [vmem:[#allocation13 + $0xf0] sm:$0xff]
    %v1034 = vld [vmem:[#allocation13 + $0xf8] sm:$0xff]
    %v1067 = vunpack.c.l.b16 %v1003
    %v1068 = vunpack.c.h.b16 %v1003
    %v1069 = vunpack.c.l.b16 %v1004
    %v1070 = vunpack.c.h.b16 %v1004
    %v1071 = vunpack.c.l.b16 %v1005
    %v1072 = vunpack.c.h.b16 %v1005
    %v1073 = vunpack.c.l.b16 %v1006
    %v1074 = vunpack.c.h.b16 %v1006
    %v1075 = vunpack.c.l.b16 %v1007
    %v1076 = vunpack.c.h.b16 %v1007
    %v1077 = vunpack.c.l.b16 %v1008
    %v1078 = vunpack.c.h.b16 %v1008
    %v1079 = vunpack.c.l.b16 %v1009
    %v1080 = vunpack.c.h.b16 %v1009
    %v1081 = vunpack.c.l.b16 %v1010
    %v1082 = vunpack.c.h.b16 %v1010
    %v1083 = vunpack.c.l.b16 %v1011
    %v1084 = vunpack.c.h.b16 %v1011
    %v1085 = vunpack.c.l.b16 %v1012
    %v1086 = vunpack.c.h.b16 %v1012
    %v1087 = vunpack.c.l.b16 %v1013
    %v1088 = vunpack.c.h.b16 %v1013
    %v1089 = vunpack.c.l.b16 %v1014
    %v1090 = vunpack.c.h.b16 %v1014
    %v1091 = vunpack.c.l.b16 %v1015
    %v1092 = vunpack.c.h.b16 %v1015
    %v1093 = vunpack.c.l.b16 %v1016
    %v1094 = vunpack.c.h.b16 %v1016
    %v1095 = vunpack.c.l.b16 %v1017
    %v1096 = vunpack.c.h.b16 %v1017
    %v1097 = vunpack.c.l.b16 %v1018
    %v1098 = vunpack.c.h.b16 %v1018
    %v1099 = vunpack.c.l.b16 %v1019
    %v1100 = vunpack.c.h.b16 %v1019
    %v1101 = vunpack.c.l.b16 %v1020
    %v1102 = vunpack.c.h.b16 %v1020
    %v1103 = vunpack.c.l.b16 %v1021
    %v1104 = vunpack.c.h.b16 %v1021
    %v1105 = vunpack.c.l.b16 %v1022
    %v1106 = vunpack.c.h.b16 %v1022
    %v1107 = vunpack.c.l.b16 %v1023
    %v1108 = vunpack.c.h.b16 %v1023
    %v1109 = vunpack.c.l.b16 %v1024
    %v1110 = vunpack.c.h.b16 %v1024
    %v1111 = vunpack.c.l.b16 %v1025
    %v1112 = vunpack.c.h.b16 %v1025
    %v1113 = vunpack.c.l.b16 %v1026
    %v1114 = vunpack.c.h.b16 %v1026
    %v1115 = vunpack.c.l.b16 %v1027
    %v1116 = vunpack.c.h.b16 %v1027
    %v1117 = vunpack.c.l.b16 %v1028
    %v1118 = vunpack.c.h.b16 %v1028
    %v1119 = vunpack.c.l.b16 %v1029
    %v1120 = vunpack.c.h.b16 %v1029
    %v1121 = vunpack.c.l.b16 %v1030
    %v1122 = vunpack.c.h.b16 %v1030
    %v1123 = vunpack.c.l.b16 %v1031
    %v1124 = vunpack.c.h.b16 %v1031
    %v1125 = vunpack.c.l.b16 %v1032
    %v1126 = vunpack.c.h.b16 %v1032
    %v1127 = vunpack.c.l.b16 %v1033
    %v1128 = vunpack.c.h.b16 %v1033
    %v1129 = vunpack.c.l.b16 %v1034
    %v1130 = vunpack.c.h.b16 %v1034
    %v1131 = vpack.c.b16 %v1071, %v1067
    %v1132 = vpack.c.b16 %v1072, %v1068
    %v1133 = vpack.c.b16 %v1073, %v1069
    %v1134 = vpack.c.b16 %v1074, %v1070
    %v1135 = vpack.c.b16 %v1079, %v1075
    %v1136 = vpack.c.b16 %v1080, %v1076
    %v1137 = vpack.c.b16 %v1081, %v1077
    %v1138 = vpack.c.b16 %v1082, %v1078
    %v1139 = vpack.c.b16 %v1087, %v1083
    %v1140 = vpack.c.b16 %v1088, %v1084
    %v1141 = vpack.c.b16 %v1089, %v1085
    %v1142 = vpack.c.b16 %v1090, %v1086
    %v1143 = vpack.c.b16 %v1095, %v1091
    %v1144 = vpack.c.b16 %v1096, %v1092
    %v1145 = vpack.c.b16 %v1097, %v1093
    %v1146 = vpack.c.b16 %v1098, %v1094
    %v1147 = vpack.c.b16 %v1103, %v1099
    %v1148 = vpack.c.b16 %v1104, %v1100
    %v1149 = vpack.c.b16 %v1105, %v1101
    %v1150 = vpack.c.b16 %v1106, %v1102
    %v1151 = vpack.c.b16 %v1111, %v1107
    %v1152 = vpack.c.b16 %v1112, %v1108
    %v1153 = vpack.c.b16 %v1113, %v1109
    %v1154 = vpack.c.b16 %v1114, %v1110
    %v1155 = vpack.c.b16 %v1119, %v1115
    %v1156 = vpack.c.b16 %v1120, %v1116
    %v1157 = vpack.c.b16 %v1121, %v1117
    %v1158 = vpack.c.b16 %v1122, %v1118
    %v1159 = vpack.c.b16 %v1127, %v1123
    %v1160 = vpack.c.b16 %v1128, %v1124
    %v1161 = vpack.c.b16 %v1129, %v1125
    %v1162 = vpack.c.b16 %v1130, %v1126
    %1195 = vmatprep.subr.bf16.mxu0 %v1132
    %1196 = vmatpush1.bf16.msra.mxu0 %v1131
    %1197 = vmatprep.subr.bf16.mxu0 %v1136
    %1198 = vmatpush1.bf16.msra.mxu0 %v1135
    %1199 = vmatprep.subr.bf16.mxu0 %v1140
    %1200 = vmatpush1.bf16.msra.mxu0 %v1139
    %1201 = vmatprep.subr.bf16.mxu0 %v1144
    %1202 = vmatpush1.bf16.msra.mxu0 %v1143
    %1203 = vmatprep.subr.bf16.mxu0 %v1148
    %1204 = vmatpush1.bf16.msra.mxu0 %v1147
    %1205 = vmatprep.subr.bf16.mxu0 %v1152
    %1206 = vmatpush1.bf16.msra.mxu0 %v1151
    %1207 = vmatprep.subr.bf16.mxu0 %v1156
    %1208 = vmatpush1.bf16.msra.mxu0 %v1155
    %1209 = vmatprep.subr.bf16.mxu0 %v1160
    %1210 = vmatpush1.bf16.msra.mxu0 %v1159
    %1211 = vmatprep.subr.bf16.mxu0 0
    %1212 = vmatpush1.bf16.msra.mxu0 0
    %1213 = vmatprep.subr.bf16.mxu0 0
    %1214 = vmatpush1.bf16.msra.mxu0 0
    %1215 = vmatprep.subr.bf16.mxu0 0
    %1216 = vmatpush1.bf16.msra.mxu0 0
    %1217 = vmatprep.subr.bf16.mxu0 0
    %1218 = vmatpush1.bf16.msra.mxu0 0
    %1219 = vmatprep.subr.bf16.mxu0 0
    %1220 = vmatpush1.bf16.msra.mxu0 0
    %1221 = vmatprep.subr.bf16.mxu0 0
    %1222 = vmatpush1.bf16.msra.mxu0 0
    %1223 = vmatprep.subr.bf16.mxu0 0
    %1224 = vmatpush1.bf16.msra.mxu0 0
    %1225 = vmatprep.subr.bf16.mxu0 0
    %1226 = vmatpush1.bf16.msra.mxu0 0
    %1227 = vmatprep.mubr.bf16.mxu0 0
    %1228 = vmatmul.mubr.bf16.gmra.mrb[0].mxu0 %v1002
    %v1229 = vpop.f32.mrb[0].mxu0
    %v1230 = vadd.f32 0.0, %v1229
    %v1231 = vpop.f32.mrb[0].mxu0
    %v1232 = vadd.f32 0.0, %v1231
    %v1233 = vpop.f32.mrb[0].mxu0
    %v1234 = vadd.f32 0.0, %v1233
    %v1235 = vpop.f32.mrb[0].mxu0
    %v1236 = vadd.f32 0.0, %v1235
    %1237 = vdwg.mxu0
    %1238 = vmatprep.subr.bf16.mxu0 %v1134
    %1239 = vmatpush1.bf16.msra.mxu0 %v1133
    %1240 = vmatprep.subr.bf16.mxu0 %v1138
    %1241 = vmatpush1.bf16.msra.mxu0 %v1137
    %1242 = vmatprep.subr.bf16.mxu0 %v1142
    %1243 = vmatpush1.bf16.msra.mxu0 %v1141
    %1244 = vmatprep.subr.bf16.mxu0 %v1146
    %1245 = vmatpush1.bf16.msra.mxu0 %v1145
    %1246 = vmatprep.subr.bf16.mxu0 %v1150
    %1247 = vmatpush1.bf16.msra.mxu0 %v1149
    %1248 = vmatprep.subr.bf16.mxu0 %v1154
    %1249 = vmatpush1.bf16.msra.mxu0 %v1153
    %1250 = vmatprep.subr.bf16.mxu0 %v1158
    %1251 = vmatpush1.bf16.msra.mxu0 %v1157
    %1252 = vmatprep.subr.bf16.mxu0 %v1162
    %1253 = vmatpush1.bf16.msra.mxu0 %v1161
    %1254 = vmatprep.subr.bf16.mxu0 0
    %1255 = vmatpush1.bf16.msra.mxu0 0
    %1256 = vmatprep.subr.bf16.mxu0 0
    %1257 = vmatpush1.bf16.msra.mxu0 0
    %1258 = vmatprep.subr.bf16.mxu0 0
    %1259 = vmatpush1.bf16.msra.mxu0 0
    %1260 = vmatprep.subr.bf16.mxu0 0
    %1261 = vmatpush1.bf16.msra.mxu0 0
    %1262 = vmatprep.subr.bf16.mxu0 0
    %1263 = vmatpush1.bf16.msra.mxu0 0
    %1264 = vmatprep.subr.bf16.mxu0 0
    %1265 = vmatpush1.bf16.msra.mxu0 0
    %1266 = vmatprep.subr.bf16.mxu0 0
    %1267 = vmatpush1.bf16.msra.mxu0 0
    %1268 = vmatprep.subr.bf16.mxu0 0
    %1269 = vmatpush1.bf16.msra.mxu0 0
    %1270 = vmatprep.mubr.bf16.mxu0 0
    %1271 = vmatmul.mubr.bf16.gmra.mrb[0].mxu0 %v1002
    %v1272 = vpop.f32.mrb[0].mxu0
    %v1273 = vadd.f32 0.0, %v1272
    %v1274 = vpop.f32.mrb[0].mxu0
    %v1275 = vadd.f32 0.0, %v1274
    %v1276 = vpop.f32.mrb[0].mxu0
    %v1277 = vadd.f32 0.0, %v1276
    %v1278 = vpop.f32.mrb[0].mxu0
    %v1279 = vadd.f32 0.0, %v1278
    %1280 = vdwg.mxu0
    %v1313 = vunpack.c.l.b16 %v967
    %v1314 = vunpack.c.h.b16 %v967
    %v1315 = vunpack.c.l.b16 %v968
    %v1316 = vunpack.c.h.b16 %v968
    %v1317 = vunpack.c.l.b16 %v969
    %v1318 = vunpack.c.h.b16 %v969
    %v1319 = vunpack.c.l.b16 %v970
    %v1320 = vunpack.c.h.b16 %v970
    %v1321 = vunpack.c.l.b16 %v971
    %v1322 = vunpack.c.h.b16 %v971
    %v1323 = vunpack.c.l.b16 %v972
    %v1324 = vunpack.c.h.b16 %v972
    %v1325 = vunpack.c.l.b16 %v973
    %v1326 = vunpack.c.h.b16 %v973
    %v1327 = vunpack.c.l.b16 %v974
    %v1328 = vunpack.c.h.b16 %v974
    %v1329 = vunpack.c.l.b16 %v975
    %v1330 = vunpack.c.h.b16 %v975
    %v1331 = vunpack.c.l.b16 %v976
    %v1332 = vunpack.c.h.b16 %v976
    %v1333 = vunpack.c.l.b16 %v977
    %v1334 = vunpack.c.h.b16 %v977
    %v1335 = vunpack.c.l.b16 %v978
    %v1336 = vunpack.c.h.b16 %v978
    %v1337 = vunpack.c.l.b16 %v979
    %v1338 = vunpack.c.h.b16 %v979
    %v1339 = vunpack.c.l.b16 %v980
    %v1340 = vunpack.c.h.b16 %v980
    %v1341 = vunpack.c.l.b16 %v981
    %v1342 = vunpack.c.h.b16 %v981
    %v1343 = vunpack.c.l.b16 %v982
    %v1344 = vunpack.c.h.b16 %v982
    %v1345 = vunpack.c.l.b16 %v983
    %v1346 = vunpack.c.h.b16 %v983
    %v1347 = vunpack.c.l.b16 %v984
    %v1348 = vunpack.c.h.b16 %v984
    %v1349 = vunpack.c.l.b16 %v985
    %v1350 = vunpack.c.h.b16 %v985
    %v1351 = vunpack.c.l.b16 %v986
    %v1352 = vunpack.c.h.b16 %v986
    %v1353 = vunpack.c.l.b16 %v987
    %v1354 = vunpack.c.h.b16 %v987
    %v1355 = vunpack.c.l.b16 %v988
    %v1356 = vunpack.c.h.b16 %v988
    %v1357 = vunpack.c.l.b16 %v989
    %v1358 = vunpack.c.h.b16 %v989
    %v1359 = vunpack.c.l.b16 %v990
    %v1360 = vunpack.c.h.b16 %v990
    %v1361 = vunpack.c.l.b16 %v991
    %v1362 = vunpack.c.h.b16 %v991
    %v1363 = vunpack.c.l.b16 %v992
    %v1364 = vunpack.c.h.b16 %v992
    %v1365 = vunpack.c.l.b16 %v993
    %v1366 = vunpack.c.h.b16 %v993
    %v1367 = vunpack.c.l.b16 %v994
    %v1368 = vunpack.c.h.b16 %v994
    %v1369 = vunpack.c.l.b16 %v995
    %v1370 = vunpack.c.h.b16 %v995
    %v1371 = vunpack.c.l.b16 %v996
    %v1372 = vunpack.c.h.b16 %v996
    %v1373 = vunpack.c.l.b16 %v997
    %v1374 = vunpack.c.h.b16 %v997
    %v1375 = vunpack.c.l.b16 %v998
    %v1376 = vunpack.c.h.b16 %v998
    %v1377 = vpack.c.b16 %v1317, %v1313
    %v1378 = vpack.c.b16 %v1318, %v1314
    %v1379 = vpack.c.b16 %v1319, %v1315
    %v1380 = vpack.c.b16 %v1320, %v1316
    %v1381 = vpack.c.b16 %v1325, %v1321
    %v1382 = vpack.c.b16 %v1326, %v1322
    %v1383 = vpack.c.b16 %v1327, %v1323
    %v1384 = vpack.c.b16 %v1328, %v1324
    %v1385 = vpack.c.b16 %v1333, %v1329
    %v1386 = vpack.c.b16 %v1334, %v1330
    %v1387 = vpack.c.b16 %v1335, %v1331
    %v1388 = vpack.c.b16 %v1336, %v1332
    %v1389 = vpack.c.b16 %v1341, %v1337
    %v1390 = vpack.c.b16 %v1342, %v1338
    %v1391 = vpack.c.b16 %v1343, %v1339
    %v1392 = vpack.c.b16 %v1344, %v1340
    %v1393 = vpack.c.b16 %v1349, %v1345
    %v1394 = vpack.c.b16 %v1350, %v1346
    %v1395 = vpack.c.b16 %v1351, %v1347
    %v1396 = vpack.c.b16 %v1352, %v1348
    %v1397 = vpack.c.b16 %v1357, %v1353
    %v1398 = vpack.c.b16 %v1358, %v1354
    %v1399 = vpack.c.b16 %v1359, %v1355
    %v1400 = vpack.c.b16 %v1360, %v1356
    %v1401 = vpack.c.b16 %v1365, %v1361
    %v1402 = vpack.c.b16 %v1366, %v1362
    %v1403 = vpack.c.b16 %v1367, %v1363
    %v1404 = vpack.c.b16 %v1368, %v1364
    %v1405 = vpack.c.b16 %v1373, %v1369
    %v1406 = vpack.c.b16 %v1374, %v1370
    %v1407 = vpack.c.b16 %v1375, %v1371
    %v1408 = vpack.c.b16 %v1376, %v1372
    %1441 = vmatprep.subr.bf16.mxu0 %v1378
    %1442 = vmatpush1.bf16.msra.mxu0 %v1377
    %1443 = vmatprep.subr.bf16.mxu0 %v1382
    %1444 = vmatpush1.bf16.msra.mxu0 %v1381
    %1445 = vmatprep.subr.bf16.mxu0 %v1386
    %1446 = vmatpush1.bf16.msra.mxu0 %v1385
    %1447 = vmatprep.subr.bf16.mxu0 %v1390
    %1448 = vmatpush1.bf16.msra.mxu0 %v1389
    %1449 = vmatprep.subr.bf16.mxu0 %v1394
    %1450 = vmatpush1.bf16.msra.mxu0 %v1393
    %1451 = vmatprep.subr.bf16.mxu0 %v1398
    %1452 = vmatpush1.bf16.msra.mxu0 %v1397
    %1453 = vmatprep.subr.bf16.mxu0 %v1402
    %1454 = vmatpush1.bf16.msra.mxu0 %v1401
    %1455 = vmatprep.subr.bf16.mxu0 %v1406
    %1456 = vmatpush1.bf16.msra.mxu0 %v1405
    %1457 = vmatprep.subr.bf16.mxu0 0
    %1458 = vmatpush1.bf16.msra.mxu0 0
    %1459 = vmatprep.subr.bf16.mxu0 0
    %1460 = vmatpush1.bf16.msra.mxu0 0
    %1461 = vmatprep.subr.bf16.mxu0 0
    %1462 = vmatpush1.bf16.msra.mxu0 0
    %1463 = vmatprep.subr.bf16.mxu0 0
    %1464 = vmatpush1.bf16.msra.mxu0 0
    %1465 = vmatprep.subr.bf16.mxu0 0
    %1466 = vmatpush1.bf16.msra.mxu0 0
    %1467 = vmatprep.subr.bf16.mxu0 0
    %1468 = vmatpush1.bf16.msra.mxu0 0
    %1469 = vmatprep.subr.bf16.mxu0 0
    %1470 = vmatpush1.bf16.msra.mxu0 0
    %1471 = vmatprep.subr.bf16.mxu0 0
    %1472 = vmatpush1.bf16.msra.mxu0 0
    %1473 = vmatprep.mubr.bf16.mxu0 0
    %1474 = vmatmul.mubr.bf16.gmra.mrb[0].mxu0 %v966
    %v1475 = vpop.f32.mrb[0].mxu0
    %v1476 = vadd.f32 %v1230, %v1475
    %v1477 = vpop.f32.mrb[0].mxu0
    %v1478 = vadd.f32 %v1232, %v1477
    %v1479 = vpop.f32.mrb[0].mxu0
    %v1480 = vadd.f32 %v1234, %v1479
    %v1481 = vpop.f32.mrb[0].mxu0
    %v1482 = vadd.f32 %v1236, %v1481
    %1483 = vdwg.mxu0
    %1484 = vmatprep.subr.bf16.mxu0 %v1380
    %1485 = vmatpush1.bf16.msra.mxu0 %v1379
    %1486 = vmatprep.subr.bf16.mxu0 %v1384
    %1487 = vmatpush1.bf16.msra.mxu0 %v1383
    %1488 = vmatprep.subr.bf16.mxu0 %v1388
    %1489 = vmatpush1.bf16.msra.mxu0 %v1387
    %1490 = vmatprep.subr.bf16.mxu0 %v1392
    %1491 = vmatpush1.bf16.msra.mxu0 %v1391
    %1492 = vmatprep.subr.bf16.mxu0 %v1396
    %1493 = vmatpush1.bf16.msra.mxu0 %v1395
    %1494 = vmatprep.subr.bf16.mxu0 %v1400
    %1495 = vmatpush1.bf16.msra.mxu0 %v1399
    %1496 = vmatprep.subr.bf16.mxu0 %v1404
    %1497 = vmatpush1.bf16.msra.mxu0 %v1403
    %1498 = vmatprep.subr.bf16.mxu0 %v1408
    %1499 = vmatpush1.bf16.msra.mxu0 %v1407
    %1500 = vmatprep.subr.bf16.mxu0 0
    %1501 = vmatpush1.bf16.msra.mxu0 0
    %1502 = vmatprep.subr.bf16.mxu0 0
    %1503 = vmatpush1.bf16.msra.mxu0 0
    %1504 = vmatprep.subr.bf16.mxu0 0
    %1505 = vmatpush1.bf16.msra.mxu0 0
    %1506 = vmatprep.subr.bf16.mxu0 0
    %1507 = vmatpush1.bf16.msra.mxu0 0
    %1508 = vmatprep.subr.bf16.mxu0 0
    %1509 = vmatpush1.bf16.msra.mxu0 0
    %1510 = vmatprep.subr.bf16.mxu0 0
    %1511 = vmatpush1.bf16.msra.mxu0 0
    %1512 = vmatprep.subr.bf16.mxu0 0
    %1513 = vmatpush1.bf16.msra.mxu0 0
    %1514 = vmatprep.subr.bf16.mxu0 0
    %1515 = vmatpush1.bf16.msra.mxu0 0
    %1516 = vmatprep.mubr.bf16.mxu0 0
    %1517 = vmatmul.mubr.bf16.gmra.mrb[0].mxu0 %v966
    %v1518 = vpop.f32.mrb[0].mxu0
    %v1519 = vadd.f32 %v1273, %v1518
    %v1520 = vpop.f32.mrb[0].mxu0
    %v1521 = vadd.f32 %v1275, %v1520
    %v1522 = vpop.f32.mrb[0].mxu0
    %v1523 = vadd.f32 %v1277, %v1522
    %v1524 = vpop.f32.mrb[0].mxu0
    %v1525 = vadd.f32 %v1279, %v1524
    %1526 = vdwg.mxu0
    %v1527 = vld [vmem:[%s8] sm:$0xf]
    %v1529 = vlaneseq
    %v1530 = vshrl.u32 %v1529, 7
    %v1531 = vsub.s32 0, %v1530
    %v1532 = vrot.slane %v1527, %v1531
    %v1533 = vlaneseq
    %v1534 = vshrl.u32 %v1533, 7
    %v1535 = vsub.s32 1, %v1534
    %v1536 = vrot.slane %v1527, %v1535
    %v1537 = vlaneseq
    %v1538 = vshrl.u32 %v1537, 7
    %v1539 = vsub.s32 2, %v1538
    %v1540 = vrot.slane %v1527, %v1539
    %v1541 = vlaneseq
    %v1542 = vshrl.u32 %v1541, 7
    %v1543 = vsub.s32 3, %v1542
    %v1544 = vrot.slane %v1527, %v1543
    %v1549 = vadd.f32 %v1476, %v1532
    %v1550 = vadd.f32 %v1478, %v1536
    %v1551 = vadd.f32 %v1519, %v1540
    %v1552 = vadd.f32 %v1521, %v1544
    %v1553 = vadd.f32 %v1480, %v1532
    %v1554 = vadd.f32 %v1482, %v1536
    %v1555 = vadd.f32 %v1523, %v1540
    %v1556 = vadd.f32 %v1525, %v1544
    %v1557 = vxor.u32 %v1549, 2147483648
    %v1558 = vxor.u32 %v1553, 2147483648
    %v1559 = vmul.f32 %v1557, 1.442695
    %v1560 = vpow.pop %v1559
    %v1561 = vmul.f32 %v1558, 1.442695
    %v1562 = vpow.pop %v1561
    %v1563 = vadd.f32 %v1560, 1.0
    %v1564 = vadd.f32 %v1562, 1.0
    %v1565 = vrcp.pop %v1563
    %v1566 = vmul.f32 1.0, %v1565
    %v1567 = vrcp.pop %v1564
    %v1568 = vmul.f32 1.0, %v1567
    %v1569 = vxor.u32 %v1550, 2147483648
    %v1570 = vxor.u32 %v1554, 2147483648
    %v1571 = vmul.f32 %v1569, 1.442695
    %v1572 = vpow.pop %v1571
    %v1573 = vmul.f32 %v1570, 1.442695
    %v1574 = vpow.pop %v1573
    %v1575 = vadd.f32 %v1572, 1.0
    %v1576 = vadd.f32 %v1574, 1.0
    %v1577 = vrcp.pop %v1575
    %v1578 = vmul.f32 1.0, %v1577
    %v1579 = vrcp.pop %v1576
    %v1580 = vmul.f32 1.0, %v1579
    %v1581 = vtanh.pop %v1551
    %v1582 = vtanh.pop %v1555
    %v1583 = vxor.u32 %v1552, 2147483648
    %v1584 = vxor.u32 %v1556, 2147483648
    %v1585 = vmul.f32 %v1583, 1.442695
    %v1586 = vpow.pop %v1585
    %v1587 = vmul.f32 %v1584, 1.442695
    %v1588 = vpow.pop %v1587
    %v1589 = vadd.f32 %v1586, 1.0
    %v1590 = vadd.f32 %v1588, 1.0
    %v1591 = vrcp.pop %v1589
    %v1592 = vmul.f32 1.0, %v1591
    %v1593 = vrcp.pop %v1590
    %v1594 = vmul.f32 1.0, %v1593
    %s1595 = scalar_lea.vmem [#allocation7], 16
    %v1596 = vld [vmem:[%s1595] sm:$0xff]
    %v1597 = vld [vmem:[%s1595 + $0x8] sm:$0xff]
    %v1598 = vmul.f32 %v1578, %v1596
    %v1599 = vmul.f32 %v1580, %v1597
    %v1600 = vmul.f32 %v1566, %v1581
    %v1601 = vmul.f32 %v1568, %v1582
    %v1602 = vadd.f32 %v1598, %v1600
    %v1603 = vadd.f32 %v1599, %v1601
    %v1604 = vtanh.pop %v1602
    %v1605 = vtanh.pop %v1603
    %v1606 = vmul.f32 %v1592, %v1604
    %v1607 = vmul.f32 %v1594, %v1605
    %1608 = vst [vmem:[#allocation14] sm:$0xff] %v1606
    %1609 = vst [vmem:[#allocation14 + $0x8] sm:$0xff] %v1607
    // Predicated region
    $region66: #{tpu_custom_call.1} parent=1 // pred_check
      _
    $region67: #{tpu_custom_call.1} parent=1 // pred_check_branch
      %1611 = sbr.rel (0) target = $region69
    $region68: #{tpu_custom_call.1} parent=1 // pred_region
      %s1613 = ssub.s32 256, 256
      %1614 = vsyncadd [#allocation4], %s1613
      %s1615 = sshll.u32 [#allocation14], 4
      %s1616 = int_to_ptr.vmem [resolvable:$true] %s1615
      %1621 = dma.vmem_to_hbm [thread:$0]  %s1616, 256, %s9, [#allocation4], 128, 128, 8
    $region69: #{tpu_custom_call.1} parent=1 // pred_fallthru
      _
    // Predicated region
    $region70: #{tpu_custom_call.1} parent=1 // pred_check
      _
    $region71: #{tpu_custom_call.1} parent=1 // pred_check_branch
      %1623 = sbr.rel (0) target = $region73
    $region72: #{tpu_custom_call.1} parent=1 // pred_region
      %1624 = dma.done [#allocation4], 256
    $region73: #{tpu_custom_call.1} parent=1 // pred_fallthru
      _
    %1625 = vsyncpa [#allocation3], 1
    %1626 = vsyncpa [#allocation6], 1
    %1627 = vsyncpa [#allocation9], 1
    %1628 = vsyncpa [#allocation12], 1
    %1629 = vsyncpa [#allocation4], 1

</llo_original>
